<compile_context>
chip_gen: v6e
topology: v6e:2x2x1
jax: 0.10.0
libtpu: 0.0.40
codegen_flags: <defaults>
</compile_context>

<pallas_src>
import jax
import jax.numpy as jnp
from jax import lax
from jax.experimental import pallas as pl
from jax.experimental.pallas import tpu as pltpu

B, S_SRC, T_TGT = 2, 8, 8          # batch, src length, tgt length
EMBED, HIDDEN = 32, 32             # embed_size, hidden_size
SRC_VOCAB, TGT_VOCAB = 96, 128     # vocab sizes (tgt vocab lane-friendly)
STEPS = T_TGT - 1                  # teacher-forcing decode steps
N_TOK = B * STEPS                  # flattened (step, batch) token count
LANES = 128                        # lane stride of the packed weight slab


# ----------------------------------------------------------------------------
# parameter init (deterministic, mirrors initialize_parameters: xavier uniform
# for >1D params, zero linear biases, LSTM forget-gate bias = 1.0).  Weights /
# biases are packed into two lane-aligned slabs so the kernel takes 6 inputs.
# ----------------------------------------------------------------------------
def _xavier(key, shape):
    fan_in, fan_out = shape[0], shape[1]
    limit = (6.0 / (fan_in + fan_out)) ** 0.5
    return jax.random.uniform(key, shape, jnp.float32, -limit, limit)


def _pad_lanes(w, lanes=LANES):
    return jnp.pad(w, ((0, 0), (0, lanes - w.shape[1])))


def init_params(seed=3):
    keys = jax.random.split(jax.random.PRNGKey(seed), 6)
    w_enc = _xavier(keys[2], (EMBED, HIDDEN))
    w_ih = _xavier(keys[3], (EMBED, 4 * HIDDEN))
    w_hh = _xavier(keys[4], (HIDDEN, 4 * HIDDEN))
    w_out = _xavier(keys[5], (HIDDEN, TGT_VOCAB))

    b_enc = jnp.zeros((1, HIDDEN), jnp.float32)
    b_lstm = jnp.zeros((1, 4 * HIDDEN), jnp.float32)
    b_lstm = b_lstm.at[:, HIDDEN:2 * HIDDEN].set(1.0)   # forget gate bias = 1
    b_out = jnp.zeros((1, TGT_VOCAB), jnp.float32)

    # single (E, 4*128) weight slab, 128-lane-aligned columns:
    #   lanes [  0:128) = w_enc (only first HIDDEN lanes used)
    #   lanes [128:256) = w_ih
    #   lanes [256:384) = w_hh
    #   lanes [384:512) = w_out
    w_pack = jnp.concatenate([_pad_lanes(w_enc), w_ih, w_hh, w_out], axis=1)
    # single (3, 128) bias slab: row 0 = b_enc (padded), row 1 = b_lstm, row 2 = b_out
    b_pack = jnp.concatenate([_pad_lanes(b_enc), b_lstm, b_out], axis=0)

    return {
        "src_embed": _xavier(keys[0], (SRC_VOCAB, EMBED)),
        "tgt_embed": _xavier(keys[1], (TGT_VOCAB, EMBED)),
        "w_pack": w_pack,
        "b_pack": b_pack,
    }


# ----------------------------------------------------------------------------
# fused kernel: encoder pooling + LSTM recurrence + expand + NLL / word-acc
# ----------------------------------------------------------------------------
def fused_forward_kernel(src_emb_ref, src_mask_ref, fb_ref, tgt_ref,
                         w_ref, b_ref, out_ref):
    H, V = HIDDEN, TGT_VOCAB

    # static, lane-aligned views into the packed parameter slabs
    w_enc = w_ref[:, 0:H]                       # (E, H)
    w_ih = w_ref[:, LANES:2 * LANES]            # (E, 4H)
    w_hh = w_ref[:, 2 * LANES:3 * LANES]        # (H, 4H)
    w_out = w_ref[:, 3 * LANES:4 * LANES]       # (H, V)
    b_enc = b_ref[0:1, 0:H]                     # (1, H)
    b_lstm = b_ref[1:2, :]                      # (1, 4H)
    b_out = b_ref[2:3, :]                       # (1, V)

    # ---- encoder: masked mean-pool over source embeddings + linear + tanh ---
    emb = src_emb_ref[...]                                   # (B, S, E)
    mask = src_mask_ref[...]                                 # (B, S)
    pooled = jnp.sum(emb * mask[:, :, None], axis=1)         # (B, E)
    denom = jnp.maximum(jnp.sum(mask, axis=1, keepdims=True), 1.0)
    pooled = pooled / denom
    h = jnp.tanh(jnp.dot(pooled, w_enc,
                         preferred_element_type=jnp.float32) + b_enc)
    c = jnp.zeros_like(h)          # cell state initialized to zeros (pre_decode)

    # ---- hoisted decoder input projection (bias folded in) ------------------
    # fb_ref is time-major flat: row t*B + b.
    gates_x = (jnp.dot(fb_ref[...], w_ih,
                       preferred_element_type=jnp.float32) + b_lstm)  # (N, 4H)

    # hoisted loop-invariants (JAX does not CSE broadcast_in_dim)
    iota = lax.broadcasted_iota(jnp.int32, (B, V), 1)
    loss_vec = jnp.zeros((B, 1), jnp.float32)
    acc_vec = jnp.zeros((B, 1), jnp.float32)
    norm_vec = jnp.zeros((B, 1), jnp.float32)

    # ---- fully-unrolled recurrence; h/c live in vregs (no VMEM slab) ---------
    for t in range(STEPS):                                   # static unroll
        g = gates_x[t * B:(t + 1) * B, :] + jnp.dot(
            h, w_hh, preferred_element_type=jnp.float32)     # (B, 4H)
        # gate order i, f, g, o.  One sigmoid over all 4H lanes (single EUP
        # pass over the vreg) + one tanh slice, instead of three sliced
        # sigmoids; the g-gate lanes of sg are simply unused.
        sg = jax.nn.sigmoid(g)
        g_g = jnp.tanh(g[:, 2 * H:3 * H])
        c = sg[:, H:2 * H] * c + sg[:, 0:H] * g_g
        h = sg[:, 3 * H:4 * H] * jnp.tanh(c)

        # expand + log-softmax + NLL(ignore_index=0) + argmax for this step.
        # Not on the serial chain (only h/c carry), so it overlaps with the
        # next step's recurrence in the unrolled schedule.
        logits = jnp.dot(h, w_out,
                         preferred_element_type=jnp.float32) + b_out  # (B, V)
        m = jnp.max(logits, axis=-1, keepdims=True)
        lse = m + jnp.log(jnp.sum(jnp.exp(logits - m), axis=-1, keepdims=True))
        tgt = tgt_ref[t * B:(t + 1) * B, :]                  # (B, 1) int32
        picked = jnp.sum(jnp.where(iota == tgt, logits - lse, 0.0),
                         axis=-1, keepdims=True)             # logp at target
        valid = (tgt != 0).astype(jnp.float32)               # ignore_index=0
        # first maximal index == torch argmax; exact f32 equality is fine
        # since m is a copy of a logits element (no arithmetic applied).
        preds = jnp.min(jnp.where(logits == m, iota, V), axis=-1, keepdims=True)

        loss_vec = loss_vec - picked * valid
        acc_vec = acc_vec + (preds == tgt).astype(jnp.float32) * valid
        norm_vec = norm_vec + valid

    # norm = sum(tgt_mask[:, 1:]) as in the reference; guarded against 0/0.
    norm = jnp.maximum(jnp.sum(norm_vec), 1.0)
    out_ref[0] = jnp.sum(loss_vec) / norm
    out_ref[1] = jnp.sum(acc_vec) / norm


def fused_forward(src_emb, src_mask, fb_tm, tgt_tm, p):
    vmem = pl.BlockSpec(memory_space=pltpu.MemorySpace.VMEM)
    return pl.pallas_call(
        fused_forward_kernel,
        out_shape=jax.ShapeDtypeStruct((2,), jnp.float32),
        in_specs=[vmem] * 6,
        out_specs=pl.BlockSpec(memory_space=pltpu.MemorySpace.SMEM),
    )(src_emb, src_mask, fb_tm, tgt_tm, p["w_pack"], p["b_pack"])


# ----------------------------------------------------------------------------
# forward: mirrors EncoderDecoderModel.forward (loss + word_acc monitors)
# ----------------------------------------------------------------------------
# TODO(synk): shard-loss backward bookkeeping / grad-sync / line_profiler and
# the sampling branch are training-loop plumbing with no Pallas equivalent;
# with B <= shard_size the single-shard loss computed here is identical.
def forward(params, src_seq, tgt_seq):
    src_mask = (src_seq != 0).astype(jnp.float32)            # to_float(ne(src,0))

    # embedding lookups stay in XLA (gather); everything else is one kernel.
    src_emb = params["src_embed"][src_seq]                   # (B, S, E)
    fb = params["tgt_embed"][tgt_seq[:, :STEPS]]             # lookup_feedback

    # tiny time-major flattening so the in-kernel loop uses static row slices
    fb_tm = jnp.transpose(fb, (1, 0, 2)).reshape(N_TOK, EMBED)
    tgt_tm = jnp.transpose(tgt_seq[:, 1:], (1, 0)).reshape(N_TOK, 1).astype(jnp.int32)

    out = fused_forward(src_emb, src_mask, fb_tm, tgt_tm, params)
    return {"loss": out[0], "word_acc": out[1]}


if __name__ == "__main__":
    params = init_params(seed=3)
    key = jax.random.PRNGKey(0)
    k1, k2 = jax.random.split(key)
    src_seq = jax.random.randint(k1, (B, S_SRC), 1, SRC_VOCAB, dtype=jnp.int32)
    tgt_seq = jax.random.randint(k2, (B, T_TGT), 1, TGT_VOCAB, dtype=jnp.int32)
    # deterministic padding to exercise the masks / ignore_index=0 path
    src_seq = src_seq.at[1, -2:].set(0)
    tgt_seq = tgt_seq.at[1, -1:].set(0)

    out = jax.jit(forward)(params, src_seq, tgt_seq)
    jax.block_until_ready(out)
    assert jnp.isfinite(out["loss"]) and jnp.isfinite(out["word_acc"])
    print("KERNEL_OK")
</pallas_src>

<mosaic_0001>
module attributes {stable_mosaic.version = 11 : i64} {
  func.func @fused_forward_kernel(%arg0: memref<2x8x32xf32, #tpu.memory_space<vmem>>, %arg1: memref<2x8xf32, #tpu.memory_space<vmem>>, %arg2: memref<14x32xf32, #tpu.memory_space<vmem>>, %arg3: memref<14x1xi32, #tpu.memory_space<vmem>>, %arg4: memref<32x512xf32, #tpu.memory_space<vmem>>, %arg5: memref<3x128xf32, #tpu.memory_space<vmem>>, %arg6: memref<2xf32, #tpu.memory_space<smem>>) attributes {dimension_semantics = [], scalar_prefetch = 0 : i64, scratch_operands = 0 : i64, tpu.core_type = #tpu.core_type<tc>} {
    %c0 = arith.constant 0 : index
    %c0_0 = arith.constant 0 : index
    %0 = vector.load %arg4[%c0, %c0_0] : memref<32x512xf32, #tpu.memory_space<vmem>>, vector<32x32xf32>
    %c0_1 = arith.constant 0 : index
    %c128 = arith.constant 128 : index
    %1 = vector.load %arg4[%c0_1, %c128] : memref<32x512xf32, #tpu.memory_space<vmem>>, vector<32x128xf32>
    %c0_2 = arith.constant 0 : index
    %c256 = arith.constant 256 : index
    %2 = vector.load %arg4[%c0_2, %c256] : memref<32x512xf32, #tpu.memory_space<vmem>>, vector<32x128xf32>
    %c0_3 = arith.constant 0 : index
    %c384 = arith.constant 384 : index
    %3 = vector.load %arg4[%c0_3, %c384] : memref<32x512xf32, #tpu.memory_space<vmem>>, vector<32x128xf32>
    %c0_4 = arith.constant 0 : index
    %c0_5 = arith.constant 0 : index
    %4 = vector.load %arg5[%c0_4, %c0_5] : memref<3x128xf32, #tpu.memory_space<vmem>>, vector<1x32xf32>
    %c1 = arith.constant 1 : index
    %c0_6 = arith.constant 0 : index
    %5 = vector.load %arg5[%c1, %c0_6] : memref<3x128xf32, #tpu.memory_space<vmem>>, vector<1x128xf32>
    %c2 = arith.constant 2 : index
    %c0_7 = arith.constant 0 : index
    %6 = vector.load %arg5[%c2, %c0_7] : memref<3x128xf32, #tpu.memory_space<vmem>>, vector<1x128xf32>
    %c0_8 = arith.constant 0 : index
    %c0_9 = arith.constant 0 : index
    %c0_10 = arith.constant 0 : index
    %7 = vector.load %arg0[%c0_8, %c0_9, %c0_10] : memref<2x8x32xf32, #tpu.memory_space<vmem>>, vector<2x8x32xf32>
    %c0_11 = arith.constant 0 : index
    %c0_12 = arith.constant 0 : index
    %8 = vector.load %arg1[%c0_11, %c0_12] : memref<2x8xf32, #tpu.memory_space<vmem>>, vector<2x8xf32>
    %9 = vector.shape_cast %8 : vector<2x8xf32> to vector<2x8x1xf32>
    %10 = vector.broadcast %9 : vector<2x8x1xf32> to vector<2x8x32xf32>
    %11 = arith.mulf %7, %10 : vector<2x8x32xf32>
    %cst = arith.constant dense<0.000000e+00> : vector<2x32xf32>
    %12 = vector.multi_reduction <add>, %11, %cst [1] : vector<2x8x32xf32> to vector<2x32xf32>
    %cst_13 = arith.constant dense<0.000000e+00> : vector<2xf32>
    %13 = vector.multi_reduction <add>, %8, %cst_13 [1] : vector<2x8xf32> to vector<2xf32>
    %14 = vector.shape_cast %13 : vector<2xf32> to vector<2x1xf32>
    %cst_14 = arith.constant 1.000000e+00 : f32
    %15 = vector.broadcast %cst_14 : f32 to vector<2x1xf32>
    %16 = arith.maximumf %14, %15 : vector<2x1xf32>
    %17 = vector.broadcast %16 : vector<2x1xf32> to vector<2x32xf32>
    %18 = arith.divf %12, %17 : vector<2x32xf32>
    %cst_15 = arith.constant dense<0.000000e+00> : vector<2x32xf32>
    %19 = tpu.matmul %18, %0, %cst_15 {dimension_numbers = #tpu.dot_dimension_numbers<[1], [0], [0], [1], [0, 0, 1, 1], [], []>} : vector<2x32xf32>, vector<32x32xf32>, vector<2x32xf32> -> vector<2x32xf32>
    %20 = vector.broadcast %4 : vector<1x32xf32> to vector<2x32xf32>
    %21 = arith.addf %19, %20 : vector<2x32xf32>
    %22 = math.tanh %21 : vector<2x32xf32>
    %cst_16 = arith.constant 0.000000e+00 : f32
    %23 = vector.broadcast %cst_16 : f32 to vector<2x32xf32>
    %c0_17 = arith.constant 0 : index
    %c0_18 = arith.constant 0 : index
    %24 = vector.load %arg2[%c0_17, %c0_18] : memref<14x32xf32, #tpu.memory_space<vmem>>, vector<14x32xf32>
    %cst_19 = arith.constant dense<0.000000e+00> : vector<14x128xf32>
    %25 = tpu.matmul %24, %1, %cst_19 {dimension_numbers = #tpu.dot_dimension_numbers<[1], [0], [0], [1], [0, 0, 1, 1], [], []>} : vector<14x32xf32>, vector<32x128xf32>, vector<14x128xf32> -> vector<14x128xf32>
    %26 = vector.broadcast %5 : vector<1x128xf32> to vector<14x128xf32>
    %27 = arith.addf %25, %26 : vector<14x128xf32>
    %28 = tpu.iota {dimensions = array<i32: 1>} : vector<2x128xi32>
    %cst_20 = arith.constant 0.000000e+00 : f32
    %29 = vector.broadcast %cst_20 : f32 to vector<2x1xf32>
    %cst_21 = arith.constant 0.000000e+00 : f32
    %30 = vector.broadcast %cst_21 : f32 to vector<2x1xf32>
    %cst_22 = arith.constant 0.000000e+00 : f32
    %31 = vector.broadcast %cst_22 : f32 to vector<2x1xf32>
    %32 = vector.extract_strided_slice %27 {offsets = [0, 0], sizes = [2, 128], strides = [1, 1]} : vector<14x128xf32> to vector<2x128xf32>
    %cst_23 = arith.constant dense<0.000000e+00> : vector<2x128xf32>
    %33 = tpu.matmul %22, %2, %cst_23 {dimension_numbers = #tpu.dot_dimension_numbers<[1], [0], [0], [1], [0, 0, 1, 1], [], []>} : vector<2x32xf32>, vector<32x128xf32>, vector<2x128xf32> -> vector<2x128xf32>
    %34 = arith.addf %32, %33 : vector<2x128xf32>
    %35 = arith.negf %34 : vector<2x128xf32>
    %36 = math.exp %35 : vector<2x128xf32>
    %cst_24 = arith.constant 1.000000e+00 : f32
    %37 = vector.broadcast %cst_24 : f32 to vector<2x128xf32>
    %38 = arith.addf %37, %36 : vector<2x128xf32>
    %39 = arith.divf %37, %38 : vector<2x128xf32>
    %40 = vector.extract_strided_slice %34 {offsets = [0, 64], sizes = [2, 32], strides = [1, 1]} : vector<2x128xf32> to vector<2x32xf32>
    %41 = math.tanh %40 : vector<2x32xf32>
    %42 = vector.extract_strided_slice %39 {offsets = [0, 32], sizes = [2, 32], strides = [1, 1]} : vector<2x128xf32> to vector<2x32xf32>
    %43 = arith.mulf %42, %23 : vector<2x32xf32>
    %44 = vector.extract_strided_slice %39 {offsets = [0, 0], sizes = [2, 32], strides = [1, 1]} : vector<2x128xf32> to vector<2x32xf32>
    %45 = arith.mulf %44, %41 : vector<2x32xf32>
    %46 = arith.addf %43, %45 : vector<2x32xf32>
    %47 = vector.extract_strided_slice %39 {offsets = [0, 96], sizes = [2, 32], strides = [1, 1]} : vector<2x128xf32> to vector<2x32xf32>
    %48 = math.tanh %46 : vector<2x32xf32>
    %49 = arith.mulf %47, %48 : vector<2x32xf32>
    %cst_25 = arith.constant dense<0.000000e+00> : vector<2x128xf32>
    %50 = tpu.matmul %49, %3, %cst_25 {dimension_numbers = #tpu.dot_dimension_numbers<[1], [0], [0], [1], [0, 0, 1, 1], [], []>} : vector<2x32xf32>, vector<32x128xf32>, vector<2x128xf32> -> vector<2x128xf32>
    %51 = vector.broadcast %6 : vector<1x128xf32> to vector<2x128xf32>
    %52 = arith.addf %50, %51 : vector<2x128xf32>
    %cst_26 = arith.constant dense<0xFF800000> : vector<2xf32>
    %53 = vector.multi_reduction <maximumf>, %52, %cst_26 [1] : vector<2x128xf32> to vector<2xf32>
    %54 = vector.shape_cast %53 : vector<2xf32> to vector<2x1xf32>
    %55 = vector.broadcast %54 : vector<2x1xf32> to vector<2x128xf32>
    %56 = arith.subf %52, %55 : vector<2x128xf32>
    %57 = math.exp %56 : vector<2x128xf32>
    %cst_27 = arith.constant dense<0.000000e+00> : vector<2xf32>
    %58 = vector.multi_reduction <add>, %57, %cst_27 [1] : vector<2x128xf32> to vector<2xf32>
    %59 = vector.shape_cast %58 : vector<2xf32> to vector<2x1xf32>
    %60 = math.log %59 : vector<2x1xf32>
    %61 = arith.addf %54, %60 : vector<2x1xf32>
    %c0_28 = arith.constant 0 : index
    %c0_29 = arith.constant 0 : index
    %62 = vector.load %arg3[%c0_28, %c0_29] : memref<14x1xi32, #tpu.memory_space<vmem>>, vector<2x1xi32>
    %63 = vector.broadcast %62 : vector<2x1xi32> to vector<2x128xi32>
    %64 = arith.cmpi eq, %28, %63 : vector<2x128xi32>
    %65 = vector.broadcast %61 : vector<2x1xf32> to vector<2x128xf32>
    %66 = arith.subf %52, %65 : vector<2x128xf32>
    %cst_30 = arith.constant 0.000000e+00 : f32
    %67 = vector.broadcast %cst_30 : f32 to vector<2x128xf32>
    %68 = arith.select %64, %66, %67 : vector<2x128xi1>, vector<2x128xf32>
    %cst_31 = arith.constant dense<0.000000e+00> : vector<2xf32>
    %69 = vector.multi_reduction <add>, %68, %cst_31 [1] : vector<2x128xf32> to vector<2xf32>
    %70 = vector.shape_cast %69 : vector<2xf32> to vector<2x1xf32>
    %c0_i32 = arith.constant 0 : i32
    %71 = vector.broadcast %c0_i32 : i32 to vector<2x1xi32>
    %72 = arith.cmpi ne, %62, %71 : vector<2x1xi32>
    %73 = arith.extui %72 : vector<2x1xi1> to vector<2x1xi32>
    %74 = arith.sitofp %73 : vector<2x1xi32> to vector<2x1xf32>
    %75 = vector.broadcast %54 : vector<2x1xf32> to vector<2x128xf32>
    %76 = arith.cmpf oeq, %52, %75 : vector<2x128xf32>
    %c128_i32 = arith.constant 128 : i32
    %77 = vector.broadcast %c128_i32 : i32 to vector<2x128xi32>
    %78 = arith.select %76, %28, %77 : vector<2x128xi1>, vector<2x128xi32>
    %cst_32 = arith.constant dense<2147483647> : vector<2xi32>
    %79 = vector.multi_reduction <minsi>, %78, %cst_32 [1] : vector<2x128xi32> to vector<2xi32>
    %80 = vector.shape_cast %79 : vector<2xi32> to vector<2x1xi32>
    %81 = arith.mulf %70, %74 : vector<2x1xf32>
    %82 = arith.subf %29, %81 : vector<2x1xf32>
    %83 = arith.cmpi eq, %80, %62 : vector<2x1xi32>
    %84 = arith.extui %83 : vector<2x1xi1> to vector<2x1xi32>
    %85 = arith.sitofp %84 : vector<2x1xi32> to vector<2x1xf32>
    %86 = arith.mulf %85, %74 : vector<2x1xf32>
    %87 = arith.addf %30, %86 : vector<2x1xf32>
    %88 = arith.addf %31, %74 : vector<2x1xf32>
    %89 = vector.extract_strided_slice %27 {offsets = [2, 0], sizes = [2, 128], strides = [1, 1]} : vector<14x128xf32> to vector<2x128xf32>
    %cst_33 = arith.constant dense<0.000000e+00> : vector<2x128xf32>
    %90 = tpu.matmul %49, %2, %cst_33 {dimension_numbers = #tpu.dot_dimension_numbers<[1], [0], [0], [1], [0, 0, 1, 1], [], []>} : vector<2x32xf32>, vector<32x128xf32>, vector<2x128xf32> -> vector<2x128xf32>
    %91 = arith.addf %89, %90 : vector<2x128xf32>
    %92 = arith.negf %91 : vector<2x128xf32>
    %93 = math.exp %92 : vector<2x128xf32>
    %cst_34 = arith.constant 1.000000e+00 : f32
    %94 = vector.broadcast %cst_34 : f32 to vector<2x128xf32>
    %95 = arith.addf %94, %93 : vector<2x128xf32>
    %96 = arith.divf %94, %95 : vector<2x128xf32>
    %97 = vector.extract_strided_slice %91 {offsets = [0, 64], sizes = [2, 32], strides = [1, 1]} : vector<2x128xf32> to vector<2x32xf32>
    %98 = math.tanh %97 : vector<2x32xf32>
    %99 = vector.extract_strided_slice %96 {offsets = [0, 32], sizes = [2, 32], strides = [1, 1]} : vector<2x128xf32> to vector<2x32xf32>
    %100 = arith.mulf %99, %46 : vector<2x32xf32>
    %101 = vector.extract_strided_slice %96 {offsets = [0, 0], sizes = [2, 32], strides = [1, 1]} : vector<2x128xf32> to vector<2x32xf32>
    %102 = arith.mulf %101, %98 : vector<2x32xf32>
    %103 = arith.addf %100, %102 : vector<2x32xf32>
    %104 = vector.extract_strided_slice %96 {offsets = [0, 96], sizes = [2, 32], strides = [1, 1]} : vector<2x128xf32> to vector<2x32xf32>
    %105 = math.tanh %103 : vector<2x32xf32>
    %106 = arith.mulf %104, %105 : vector<2x32xf32>
    %cst_35 = arith.constant dense<0.000000e+00> : vector<2x128xf32>
    %107 = tpu.matmul %106, %3, %cst_35 {dimension_numbers = #tpu.dot_dimension_numbers<[1], [0], [0], [1], [0, 0, 1, 1], [], []>} : vector<2x32xf32>, vector<32x128xf32>, vector<2x128xf32> -> vector<2x128xf32>
    %108 = vector.broadcast %6 : vector<1x128xf32> to vector<2x128xf32>
    %109 = arith.addf %107, %108 : vector<2x128xf32>
    %cst_36 = arith.constant dense<0xFF800000> : vector<2xf32>
    %110 = vector.multi_reduction <maximumf>, %109, %cst_36 [1] : vector<2x128xf32> to vector<2xf32>
    %111 = vector.shape_cast %110 : vector<2xf32> to vector<2x1xf32>
    %112 = vector.broadcast %111 : vector<2x1xf32> to vector<2x128xf32>
    %113 = arith.subf %109, %112 : vector<2x128xf32>
    %114 = math.exp %113 : vector<2x128xf32>
    %cst_37 = arith.constant dense<0.000000e+00> : vector<2xf32>
    %115 = vector.multi_reduction <add>, %114, %cst_37 [1] : vector<2x128xf32> to vector<2xf32>
    %116 = vector.shape_cast %115 : vector<2xf32> to vector<2x1xf32>
    %117 = math.log %116 : vector<2x1xf32>
    %118 = arith.addf %111, %117 : vector<2x1xf32>
    %c2_38 = arith.constant 2 : index
    %c0_39 = arith.constant 0 : index
    %119 = vector.load %arg3[%c2_38, %c0_39] : memref<14x1xi32, #tpu.memory_space<vmem>>, vector<2x1xi32>
    %120 = vector.broadcast %119 : vector<2x1xi32> to vector<2x128xi32>
    %121 = arith.cmpi eq, %28, %120 : vector<2x128xi32>
    %122 = vector.broadcast %118 : vector<2x1xf32> to vector<2x128xf32>
    %123 = arith.subf %109, %122 : vector<2x128xf32>
    %cst_40 = arith.constant 0.000000e+00 : f32
    %124 = vector.broadcast %cst_40 : f32 to vector<2x128xf32>
    %125 = arith.select %121, %123, %124 : vector<2x128xi1>, vector<2x128xf32>
    %cst_41 = arith.constant dense<0.000000e+00> : vector<2xf32>
    %126 = vector.multi_reduction <add>, %125, %cst_41 [1] : vector<2x128xf32> to vector<2xf32>
    %127 = vector.shape_cast %126 : vector<2xf32> to vector<2x1xf32>
    %c0_i32_42 = arith.constant 0 : i32
    %128 = vector.broadcast %c0_i32_42 : i32 to vector<2x1xi32>
    %129 = arith.cmpi ne, %119, %128 : vector<2x1xi32>
    %130 = arith.extui %129 : vector<2x1xi1> to vector<2x1xi32>
    %131 = arith.sitofp %130 : vector<2x1xi32> to vector<2x1xf32>
    %132 = vector.broadcast %111 : vector<2x1xf32> to vector<2x128xf32>
    %133 = arith.cmpf oeq, %109, %132 : vector<2x128xf32>
    %c128_i32_43 = arith.constant 128 : i32
    %134 = vector.broadcast %c128_i32_43 : i32 to vector<2x128xi32>
    %135 = arith.select %133, %28, %134 : vector<2x128xi1>, vector<2x128xi32>
    %cst_44 = arith.constant dense<2147483647> : vector<2xi32>
    %136 = vector.multi_reduction <minsi>, %135, %cst_44 [1] : vector<2x128xi32> to vector<2xi32>
    %137 = vector.shape_cast %136 : vector<2xi32> to vector<2x1xi32>
    %138 = arith.mulf %127, %131 : vector<2x1xf32>
    %139 = arith.subf %82, %138 : vector<2x1xf32>
    %140 = arith.cmpi eq, %137, %119 : vector<2x1xi32>
    %141 = arith.extui %140 : vector<2x1xi1> to vector<2x1xi32>
    %142 = arith.sitofp %141 : vector<2x1xi32> to vector<2x1xf32>
    %143 = arith.mulf %142, %131 : vector<2x1xf32>
    %144 = arith.addf %87, %143 : vector<2x1xf32>
    %145 = arith.addf %88, %131 : vector<2x1xf32>
    %146 = vector.extract_strided_slice %27 {offsets = [4, 0], sizes = [2, 128], strides = [1, 1]} : vector<14x128xf32> to vector<2x128xf32>
    %cst_45 = arith.constant dense<0.000000e+00> : vector<2x128xf32>
    %147 = tpu.matmul %106, %2, %cst_45 {dimension_numbers = #tpu.dot_dimension_numbers<[1], [0], [0], [1], [0, 0, 1, 1], [], []>} : vector<2x32xf32>, vector<32x128xf32>, vector<2x128xf32> -> vector<2x128xf32>
    %148 = arith.addf %146, %147 : vector<2x128xf32>
    %149 = arith.negf %148 : vector<2x128xf32>
    %150 = math.exp %149 : vector<2x128xf32>
    %cst_46 = arith.constant 1.000000e+00 : f32
    %151 = vector.broadcast %cst_46 : f32 to vector<2x128xf32>
    %152 = arith.addf %151, %150 : vector<2x128xf32>
    %153 = arith.divf %151, %152 : vector<2x128xf32>
    %154 = vector.extract_strided_slice %148 {offsets = [0, 64], sizes = [2, 32], strides = [1, 1]} : vector<2x128xf32> to vector<2x32xf32>
    %155 = math.tanh %154 : vector<2x32xf32>
    %156 = vector.extract_strided_slice %153 {offsets = [0, 32], sizes = [2, 32], strides = [1, 1]} : vector<2x128xf32> to vector<2x32xf32>
    %157 = arith.mulf %156, %103 : vector<2x32xf32>
    %158 = vector.extract_strided_slice %153 {offsets = [0, 0], sizes = [2, 32], strides = [1, 1]} : vector<2x128xf32> to vector<2x32xf32>
    %159 = arith.mulf %158, %155 : vector<2x32xf32>
    %160 = arith.addf %157, %159 : vector<2x32xf32>
    %161 = vector.extract_strided_slice %153 {offsets = [0, 96], sizes = [2, 32], strides = [1, 1]} : vector<2x128xf32> to vector<2x32xf32>
    %162 = math.tanh %160 : vector<2x32xf32>
    %163 = arith.mulf %161, %162 : vector<2x32xf32>
    %cst_47 = arith.constant dense<0.000000e+00> : vector<2x128xf32>
    %164 = tpu.matmul %163, %3, %cst_47 {dimension_numbers = #tpu.dot_dimension_numbers<[1], [0], [0], [1], [0, 0, 1, 1], [], []>} : vector<2x32xf32>, vector<32x128xf32>, vector<2x128xf32> -> vector<2x128xf32>
    %165 = vector.broadcast %6 : vector<1x128xf32> to vector<2x128xf32>
    %166 = arith.addf %164, %165 : vector<2x128xf32>
    %cst_48 = arith.constant dense<0xFF800000> : vector<2xf32>
    %167 = vector.multi_reduction <maximumf>, %166, %cst_48 [1] : vector<2x128xf32> to vector<2xf32>
    %168 = vector.shape_cast %167 : vector<2xf32> to vector<2x1xf32>
    %169 = vector.broadcast %168 : vector<2x1xf32> to vector<2x128xf32>
    %170 = arith.subf %166, %169 : vector<2x128xf32>
    %171 = math.exp %170 : vector<2x128xf32>
    %cst_49 = arith.constant dense<0.000000e+00> : vector<2xf32>
    %172 = vector.multi_reduction <add>, %171, %cst_49 [1] : vector<2x128xf32> to vector<2xf32>
    %173 = vector.shape_cast %172 : vector<2xf32> to vector<2x1xf32>
    %174 = math.log %173 : vector<2x1xf32>
    %175 = arith.addf %168, %174 : vector<2x1xf32>
    %c4 = arith.constant 4 : index
    %c0_50 = arith.constant 0 : index
    %176 = vector.load %arg3[%c4, %c0_50] : memref<14x1xi32, #tpu.memory_space<vmem>>, vector<2x1xi32>
    %177 = vector.broadcast %176 : vector<2x1xi32> to vector<2x128xi32>
    %178 = arith.cmpi eq, %28, %177 : vector<2x128xi32>
    %179 = vector.broadcast %175 : vector<2x1xf32> to vector<2x128xf32>
    %180 = arith.subf %166, %179 : vector<2x128xf32>
    %cst_51 = arith.constant 0.000000e+00 : f32
    %181 = vector.broadcast %cst_51 : f32 to vector<2x128xf32>
    %182 = arith.select %178, %180, %181 : vector<2x128xi1>, vector<2x128xf32>
    %cst_52 = arith.constant dense<0.000000e+00> : vector<2xf32>
    %183 = vector.multi_reduction <add>, %182, %cst_52 [1] : vector<2x128xf32> to vector<2xf32>
    %184 = vector.shape_cast %183 : vector<2xf32> to vector<2x1xf32>
    %c0_i32_53 = arith.constant 0 : i32
    %185 = vector.broadcast %c0_i32_53 : i32 to vector<2x1xi32>
    %186 = arith.cmpi ne, %176, %185 : vector<2x1xi32>
    %187 = arith.extui %186 : vector<2x1xi1> to vector<2x1xi32>
    %188 = arith.sitofp %187 : vector<2x1xi32> to vector<2x1xf32>
    %189 = vector.broadcast %168 : vector<2x1xf32> to vector<2x128xf32>
    %190 = arith.cmpf oeq, %166, %189 : vector<2x128xf32>
    %c128_i32_54 = arith.constant 128 : i32
    %191 = vector.broadcast %c128_i32_54 : i32 to vector<2x128xi32>
    %192 = arith.select %190, %28, %191 : vector<2x128xi1>, vector<2x128xi32>
    %cst_55 = arith.constant dense<2147483647> : vector<2xi32>
    %193 = vector.multi_reduction <minsi>, %192, %cst_55 [1] : vector<2x128xi32> to vector<2xi32>
    %194 = vector.shape_cast %193 : vector<2xi32> to vector<2x1xi32>
    %195 = arith.mulf %184, %188 : vector<2x1xf32>
    %196 = arith.subf %139, %195 : vector<2x1xf32>
    %197 = arith.cmpi eq, %194, %176 : vector<2x1xi32>
    %198 = arith.extui %197 : vector<2x1xi1> to vector<2x1xi32>
    %199 = arith.sitofp %198 : vector<2x1xi32> to vector<2x1xf32>
    %200 = arith.mulf %199, %188 : vector<2x1xf32>
    %201 = arith.addf %144, %200 : vector<2x1xf32>
    %202 = arith.addf %145, %188 : vector<2x1xf32>
    %203 = vector.extract_strided_slice %27 {offsets = [6, 0], sizes = [2, 128], strides = [1, 1]} : vector<14x128xf32> to vector<2x128xf32>
    %cst_56 = arith.constant dense<0.000000e+00> : vector<2x128xf32>
    %204 = tpu.matmul %163, %2, %cst_56 {dimension_numbers = #tpu.dot_dimension_numbers<[1], [0], [0], [1], [0, 0, 1, 1], [], []>} : vector<2x32xf32>, vector<32x128xf32>, vector<2x128xf32> -> vector<2x128xf32>
    %205 = arith.addf %203, %204 : vector<2x128xf32>
    %206 = arith.negf %205 : vector<2x128xf32>
    %207 = math.exp %206 : vector<2x128xf32>
    %cst_57 = arith.constant 1.000000e+00 : f32
    %208 = vector.broadcast %cst_57 : f32 to vector<2x128xf32>
    %209 = arith.addf %208, %207 : vector<2x128xf32>
    %210 = arith.divf %208, %209 : vector<2x128xf32>
    %211 = vector.extract_strided_slice %205 {offsets = [0, 64], sizes = [2, 32], strides = [1, 1]} : vector<2x128xf32> to vector<2x32xf32>
    %212 = math.tanh %211 : vector<2x32xf32>
    %213 = vector.extract_strided_slice %210 {offsets = [0, 32], sizes = [2, 32], strides = [1, 1]} : vector<2x128xf32> to vector<2x32xf32>
    %214 = arith.mulf %213, %160 : vector<2x32xf32>
    %215 = vector.extract_strided_slice %210 {offsets = [0, 0], sizes = [2, 32], strides = [1, 1]} : vector<2x128xf32> to vector<2x32xf32>
    %216 = arith.mulf %215, %212 : vector<2x32xf32>
    %217 = arith.addf %214, %216 : vector<2x32xf32>
    %218 = vector.extract_strided_slice %210 {offsets = [0, 96], sizes = [2, 32], strides = [1, 1]} : vector<2x128xf32> to vector<2x32xf32>
    %219 = math.tanh %217 : vector<2x32xf32>
    %220 = arith.mulf %218, %219 : vector<2x32xf32>
    %cst_58 = arith.constant dense<0.000000e+00> : vector<2x128xf32>
    %221 = tpu.matmul %220, %3, %cst_58 {dimension_numbers = #tpu.dot_dimension_numbers<[1], [0], [0], [1], [0, 0, 1, 1], [], []>} : vector<2x32xf32>, vector<32x128xf32>, vector<2x128xf32> -> vector<2x128xf32>
    %222 = vector.broadcast %6 : vector<1x128xf32> to vector<2x128xf32>
    %223 = arith.addf %221, %222 : vector<2x128xf32>
    %cst_59 = arith.constant dense<0xFF800000> : vector<2xf32>
    %224 = vector.multi_reduction <maximumf>, %223, %cst_59 [1] : vector<2x128xf32> to vector<2xf32>
    %225 = vector.shape_cast %224 : vector<2xf32> to vector<2x1xf32>
    %226 = vector.broadcast %225 : vector<2x1xf32> to vector<2x128xf32>
    %227 = arith.subf %223, %226 : vector<2x128xf32>
    %228 = math.exp %227 : vector<2x128xf32>
    %cst_60 = arith.constant dense<0.000000e+00> : vector<2xf32>
    %229 = vector.multi_reduction <add>, %228, %cst_60 [1] : vector<2x128xf32> to vector<2xf32>
    %230 = vector.shape_cast %229 : vector<2xf32> to vector<2x1xf32>
    %231 = math.log %230 : vector<2x1xf32>
    %232 = arith.addf %225, %231 : vector<2x1xf32>
    %c6 = arith.constant 6 : index
    %c0_61 = arith.constant 0 : index
    %233 = vector.load %arg3[%c6, %c0_61] : memref<14x1xi32, #tpu.memory_space<vmem>>, vector<2x1xi32>
    %234 = vector.broadcast %233 : vector<2x1xi32> to vector<2x128xi32>
    %235 = arith.cmpi eq, %28, %234 : vector<2x128xi32>
    %236 = vector.broadcast %232 : vector<2x1xf32> to vector<2x128xf32>
    %237 = arith.subf %223, %236 : vector<2x128xf32>
    %cst_62 = arith.constant 0.000000e+00 : f32
    %238 = vector.broadcast %cst_62 : f32 to vector<2x128xf32>
    %239 = arith.select %235, %237, %238 : vector<2x128xi1>, vector<2x128xf32>
    %cst_63 = arith.constant dense<0.000000e+00> : vector<2xf32>
    %240 = vector.multi_reduction <add>, %239, %cst_63 [1] : vector<2x128xf32> to vector<2xf32>
    %241 = vector.shape_cast %240 : vector<2xf32> to vector<2x1xf32>
    %c0_i32_64 = arith.constant 0 : i32
    %242 = vector.broadcast %c0_i32_64 : i32 to vector<2x1xi32>
    %243 = arith.cmpi ne, %233, %242 : vector<2x1xi32>
    %244 = arith.extui %243 : vector<2x1xi1> to vector<2x1xi32>
    %245 = arith.sitofp %244 : vector<2x1xi32> to vector<2x1xf32>
    %246 = vector.broadcast %225 : vector<2x1xf32> to vector<2x128xf32>
    %247 = arith.cmpf oeq, %223, %246 : vector<2x128xf32>
    %c128_i32_65 = arith.constant 128 : i32
    %248 = vector.broadcast %c128_i32_65 : i32 to vector<2x128xi32>
    %249 = arith.select %247, %28, %248 : vector<2x128xi1>, vector<2x128xi32>
    %cst_66 = arith.constant dense<2147483647> : vector<2xi32>
    %250 = vector.multi_reduction <minsi>, %249, %cst_66 [1] : vector<2x128xi32> to vector<2xi32>
    %251 = vector.shape_cast %250 : vector<2xi32> to vector<2x1xi32>
    %252 = arith.mulf %241, %245 : vector<2x1xf32>
    %253 = arith.subf %196, %252 : vector<2x1xf32>
    %254 = arith.cmpi eq, %251, %233 : vector<2x1xi32>
    %255 = arith.extui %254 : vector<2x1xi1> to vector<2x1xi32>
    %256 = arith.sitofp %255 : vector<2x1xi32> to vector<2x1xf32>
    %257 = arith.mulf %256, %245 : vector<2x1xf32>
    %258 = arith.addf %201, %257 : vector<2x1xf32>
    %259 = arith.addf %202, %245 : vector<2x1xf32>
    %260 = vector.extract_strided_slice %27 {offsets = [8, 0], sizes = [2, 128], strides = [1, 1]} : vector<14x128xf32> to vector<2x128xf32>
    %cst_67 = arith.constant dense<0.000000e+00> : vector<2x128xf32>
    %261 = tpu.matmul %220, %2, %cst_67 {dimension_numbers = #tpu.dot_dimension_numbers<[1], [0], [0], [1], [0, 0, 1, 1], [], []>} : vector<2x32xf32>, vector<32x128xf32>, vector<2x128xf32> -> vector<2x128xf32>
    %262 = arith.addf %260, %261 : vector<2x128xf32>
    %263 = arith.negf %262 : vector<2x128xf32>
    %264 = math.exp %263 : vector<2x128xf32>
    %cst_68 = arith.constant 1.000000e+00 : f32
    %265 = vector.broadcast %cst_68 : f32 to vector<2x128xf32>
    %266 = arith.addf %265, %264 : vector<2x128xf32>
    %267 = arith.divf %265, %266 : vector<2x128xf32>
    %268 = vector.extract_strided_slice %262 {offsets = [0, 64], sizes = [2, 32], strides = [1, 1]} : vector<2x128xf32> to vector<2x32xf32>
    %269 = math.tanh %268 : vector<2x32xf32>
    %270 = vector.extract_strided_slice %267 {offsets = [0, 32], sizes = [2, 32], strides = [1, 1]} : vector<2x128xf32> to vector<2x32xf32>
    %271 = arith.mulf %270, %217 : vector<2x32xf32>
    %272 = vector.extract_strided_slice %267 {offsets = [0, 0], sizes = [2, 32], strides = [1, 1]} : vector<2x128xf32> to vector<2x32xf32>
    %273 = arith.mulf %272, %269 : vector<2x32xf32>
    %274 = arith.addf %271, %273 : vector<2x32xf32>
    %275 = vector.extract_strided_slice %267 {offsets = [0, 96], sizes = [2, 32], strides = [1, 1]} : vector<2x128xf32> to vector<2x32xf32>
    %276 = math.tanh %274 : vector<2x32xf32>
    %277 = arith.mulf %275, %276 : vector<2x32xf32>
    %cst_69 = arith.constant dense<0.000000e+00> : vector<2x128xf32>
    %278 = tpu.matmul %277, %3, %cst_69 {dimension_numbers = #tpu.dot_dimension_numbers<[1], [0], [0], [1], [0, 0, 1, 1], [], []>} : vector<2x32xf32>, vector<32x128xf32>, vector<2x128xf32> -> vector<2x128xf32>
    %279 = vector.broadcast %6 : vector<1x128xf32> to vector<2x128xf32>
    %280 = arith.addf %278, %279 : vector<2x128xf32>
    %cst_70 = arith.constant dense<0xFF800000> : vector<2xf32>
    %281 = vector.multi_reduction <maximumf>, %280, %cst_70 [1] : vector<2x128xf32> to vector<2xf32>
    %282 = vector.shape_cast %281 : vector<2xf32> to vector<2x1xf32>
    %283 = vector.broadcast %282 : vector<2x1xf32> to vector<2x128xf32>
    %284 = arith.subf %280, %283 : vector<2x128xf32>
    %285 = math.exp %284 : vector<2x128xf32>
    %cst_71 = arith.constant dense<0.000000e+00> : vector<2xf32>
    %286 = vector.multi_reduction <add>, %285, %cst_71 [1] : vector<2x128xf32> to vector<2xf32>
    %287 = vector.shape_cast %286 : vector<2xf32> to vector<2x1xf32>
    %288 = math.log %287 : vector<2x1xf32>
    %289 = arith.addf %282, %288 : vector<2x1xf32>
    %c8 = arith.constant 8 : index
    %c0_72 = arith.constant 0 : index
    %290 = vector.load %arg3[%c8, %c0_72] : memref<14x1xi32, #tpu.memory_space<vmem>>, vector<2x1xi32>
    %291 = vector.broadcast %290 : vector<2x1xi32> to vector<2x128xi32>
    %292 = arith.cmpi eq, %28, %291 : vector<2x128xi32>
    %293 = vector.broadcast %289 : vector<2x1xf32> to vector<2x128xf32>
    %294 = arith.subf %280, %293 : vector<2x128xf32>
    %cst_73 = arith.constant 0.000000e+00 : f32
    %295 = vector.broadcast %cst_73 : f32 to vector<2x128xf32>
    %296 = arith.select %292, %294, %295 : vector<2x128xi1>, vector<2x128xf32>
    %cst_74 = arith.constant dense<0.000000e+00> : vector<2xf32>
    %297 = vector.multi_reduction <add>, %296, %cst_74 [1] : vector<2x128xf32> to vector<2xf32>
    %298 = vector.shape_cast %297 : vector<2xf32> to vector<2x1xf32>
    %c0_i32_75 = arith.constant 0 : i32
    %299 = vector.broadcast %c0_i32_75 : i32 to vector<2x1xi32>
    %300 = arith.cmpi ne, %290, %299 : vector<2x1xi32>
    %301 = arith.extui %300 : vector<2x1xi1> to vector<2x1xi32>
    %302 = arith.sitofp %301 : vector<2x1xi32> to vector<2x1xf32>
    %303 = vector.broadcast %282 : vector<2x1xf32> to vector<2x128xf32>
    %304 = arith.cmpf oeq, %280, %303 : vector<2x128xf32>
    %c128_i32_76 = arith.constant 128 : i32
    %305 = vector.broadcast %c128_i32_76 : i32 to vector<2x128xi32>
    %306 = arith.select %304, %28, %305 : vector<2x128xi1>, vector<2x128xi32>
    %cst_77 = arith.constant dense<2147483647> : vector<2xi32>
    %307 = vector.multi_reduction <minsi>, %306, %cst_77 [1] : vector<2x128xi32> to vector<2xi32>
    %308 = vector.shape_cast %307 : vector<2xi32> to vector<2x1xi32>
    %309 = arith.mulf %298, %302 : vector<2x1xf32>
    %310 = arith.subf %253, %309 : vector<2x1xf32>
    %311 = arith.cmpi eq, %308, %290 : vector<2x1xi32>
    %312 = arith.extui %311 : vector<2x1xi1> to vector<2x1xi32>
    %313 = arith.sitofp %312 : vector<2x1xi32> to vector<2x1xf32>
    %314 = arith.mulf %313, %302 : vector<2x1xf32>
    %315 = arith.addf %258, %314 : vector<2x1xf32>
    %316 = arith.addf %259, %302 : vector<2x1xf32>
    %317 = vector.extract_strided_slice %27 {offsets = [10, 0], sizes = [2, 128], strides = [1, 1]} : vector<14x128xf32> to vector<2x128xf32>
    %cst_78 = arith.constant dense<0.000000e+00> : vector<2x128xf32>
    %318 = tpu.matmul %277, %2, %cst_78 {dimension_numbers = #tpu.dot_dimension_numbers<[1], [0], [0], [1], [0, 0, 1, 1], [], []>} : vector<2x32xf32>, vector<32x128xf32>, vector<2x128xf32> -> vector<2x128xf32>
    %319 = arith.addf %317, %318 : vector<2x128xf32>
    %320 = arith.negf %319 : vector<2x128xf32>
    %321 = math.exp %320 : vector<2x128xf32>
    %cst_79 = arith.constant 1.000000e+00 : f32
    %322 = vector.broadcast %cst_79 : f32 to vector<2x128xf32>
    %323 = arith.addf %322, %321 : vector<2x128xf32>
    %324 = arith.divf %322, %323 : vector<2x128xf32>
    %325 = vector.extract_strided_slice %319 {offsets = [0, 64], sizes = [2, 32], strides = [1, 1]} : vector<2x128xf32> to vector<2x32xf32>
    %326 = math.tanh %325 : vector<2x32xf32>
    %327 = vector.extract_strided_slice %324 {offsets = [0, 32], sizes = [2, 32], strides = [1, 1]} : vector<2x128xf32> to vector<2x32xf32>
    %328 = arith.mulf %327, %274 : vector<2x32xf32>
    %329 = vector.extract_strided_slice %324 {offsets = [0, 0], sizes = [2, 32], strides = [1, 1]} : vector<2x128xf32> to vector<2x32xf32>
    %330 = arith.mulf %329, %326 : vector<2x32xf32>
    %331 = arith.addf %328, %330 : vector<2x32xf32>
    %332 = vector.extract_strided_slice %324 {offsets = [0, 96], sizes = [2, 32], strides = [1, 1]} : vector<2x128xf32> to vector<2x32xf32>
    %333 = math.tanh %331 : vector<2x32xf32>
    %334 = arith.mulf %332, %333 : vector<2x32xf32>
    %cst_80 = arith.constant dense<0.000000e+00> : vector<2x128xf32>
    %335 = tpu.matmul %334, %3, %cst_80 {dimension_numbers = #tpu.dot_dimension_numbers<[1], [0], [0], [1], [0, 0, 1, 1], [], []>} : vector<2x32xf32>, vector<32x128xf32>, vector<2x128xf32> -> vector<2x128xf32>
    %336 = vector.broadcast %6 : vector<1x128xf32> to vector<2x128xf32>
    %337 = arith.addf %335, %336 : vector<2x128xf32>
    %cst_81 = arith.constant dense<0xFF800000> : vector<2xf32>
    %338 = vector.multi_reduction <maximumf>, %337, %cst_81 [1] : vector<2x128xf32> to vector<2xf32>
    %339 = vector.shape_cast %338 : vector<2xf32> to vector<2x1xf32>
    %340 = vector.broadcast %339 : vector<2x1xf32> to vector<2x128xf32>
    %341 = arith.subf %337, %340 : vector<2x128xf32>
    %342 = math.exp %341 : vector<2x128xf32>
    %cst_82 = arith.constant dense<0.000000e+00> : vector<2xf32>
    %343 = vector.multi_reduction <add>, %342, %cst_82 [1] : vector<2x128xf32> to vector<2xf32>
    %344 = vector.shape_cast %343 : vector<2xf32> to vector<2x1xf32>
    %345 = math.log %344 : vector<2x1xf32>
    %346 = arith.addf %339, %345 : vector<2x1xf32>
    %c10 = arith.constant 10 : index
    %c0_83 = arith.constant 0 : index
    %347 = vector.load %arg3[%c10, %c0_83] : memref<14x1xi32, #tpu.memory_space<vmem>>, vector<2x1xi32>
    %348 = vector.broadcast %347 : vector<2x1xi32> to vector<2x128xi32>
    %349 = arith.cmpi eq, %28, %348 : vector<2x128xi32>
    %350 = vector.broadcast %346 : vector<2x1xf32> to vector<2x128xf32>
    %351 = arith.subf %337, %350 : vector<2x128xf32>
    %cst_84 = arith.constant 0.000000e+00 : f32
    %352 = vector.broadcast %cst_84 : f32 to vector<2x128xf32>
    %353 = arith.select %349, %351, %352 : vector<2x128xi1>, vector<2x128xf32>
    %cst_85 = arith.constant dense<0.000000e+00> : vector<2xf32>
    %354 = vector.multi_reduction <add>, %353, %cst_85 [1] : vector<2x128xf32> to vector<2xf32>
    %355 = vector.shape_cast %354 : vector<2xf32> to vector<2x1xf32>
    %c0_i32_86 = arith.constant 0 : i32
    %356 = vector.broadcast %c0_i32_86 : i32 to vector<2x1xi32>
    %357 = arith.cmpi ne, %347, %356 : vector<2x1xi32>
    %358 = arith.extui %357 : vector<2x1xi1> to vector<2x1xi32>
    %359 = arith.sitofp %358 : vector<2x1xi32> to vector<2x1xf32>
    %360 = vector.broadcast %339 : vector<2x1xf32> to vector<2x128xf32>
    %361 = arith.cmpf oeq, %337, %360 : vector<2x128xf32>
    %c128_i32_87 = arith.constant 128 : i32
    %362 = vector.broadcast %c128_i32_87 : i32 to vector<2x128xi32>
    %363 = arith.select %361, %28, %362 : vector<2x128xi1>, vector<2x128xi32>
    %cst_88 = arith.constant dense<2147483647> : vector<2xi32>
    %364 = vector.multi_reduction <minsi>, %363, %cst_88 [1] : vector<2x128xi32> to vector<2xi32>
    %365 = vector.shape_cast %364 : vector<2xi32> to vector<2x1xi32>
    %366 = arith.mulf %355, %359 : vector<2x1xf32>
    %367 = arith.subf %310, %366 : vector<2x1xf32>
    %368 = arith.cmpi eq, %365, %347 : vector<2x1xi32>
    %369 = arith.extui %368 : vector<2x1xi1> to vector<2x1xi32>
    %370 = arith.sitofp %369 : vector<2x1xi32> to vector<2x1xf32>
    %371 = arith.mulf %370, %359 : vector<2x1xf32>
    %372 = arith.addf %315, %371 : vector<2x1xf32>
    %373 = arith.addf %316, %359 : vector<2x1xf32>
    %374 = vector.extract_strided_slice %27 {offsets = [12, 0], sizes = [2, 128], strides = [1, 1]} : vector<14x128xf32> to vector<2x128xf32>
    %cst_89 = arith.constant dense<0.000000e+00> : vector<2x128xf32>
    %375 = tpu.matmul %334, %2, %cst_89 {dimension_numbers = #tpu.dot_dimension_numbers<[1], [0], [0], [1], [0, 0, 1, 1], [], []>} : vector<2x32xf32>, vector<32x128xf32>, vector<2x128xf32> -> vector<2x128xf32>
    %376 = arith.addf %374, %375 : vector<2x128xf32>
    %377 = arith.negf %376 : vector<2x128xf32>
    %378 = math.exp %377 : vector<2x128xf32>
    %cst_90 = arith.constant 1.000000e+00 : f32
    %379 = vector.broadcast %cst_90 : f32 to vector<2x128xf32>
    %380 = arith.addf %379, %378 : vector<2x128xf32>
    %381 = arith.divf %379, %380 : vector<2x128xf32>
    %382 = vector.extract_strided_slice %376 {offsets = [0, 64], sizes = [2, 32], strides = [1, 1]} : vector<2x128xf32> to vector<2x32xf32>
    %383 = math.tanh %382 : vector<2x32xf32>
    %384 = vector.extract_strided_slice %381 {offsets = [0, 32], sizes = [2, 32], strides = [1, 1]} : vector<2x128xf32> to vector<2x32xf32>
    %385 = arith.mulf %384, %331 : vector<2x32xf32>
    %386 = vector.extract_strided_slice %381 {offsets = [0, 0], sizes = [2, 32], strides = [1, 1]} : vector<2x128xf32> to vector<2x32xf32>
    %387 = arith.mulf %386, %383 : vector<2x32xf32>
    %388 = arith.addf %385, %387 : vector<2x32xf32>
    %389 = vector.extract_strided_slice %381 {offsets = [0, 96], sizes = [2, 32], strides = [1, 1]} : vector<2x128xf32> to vector<2x32xf32>
    %390 = math.tanh %388 : vector<2x32xf32>
    %391 = arith.mulf %389, %390 : vector<2x32xf32>
    %cst_91 = arith.constant dense<0.000000e+00> : vector<2x128xf32>
    %392 = tpu.matmul %391, %3, %cst_91 {dimension_numbers = #tpu.dot_dimension_numbers<[1], [0], [0], [1], [0, 0, 1, 1], [], []>} : vector<2x32xf32>, vector<32x128xf32>, vector<2x128xf32> -> vector<2x128xf32>
    %393 = vector.broadcast %6 : vector<1x128xf32> to vector<2x128xf32>
    %394 = arith.addf %392, %393 : vector<2x128xf32>
    %cst_92 = arith.constant dense<0xFF800000> : vector<2xf32>
    %395 = vector.multi_reduction <maximumf>, %394, %cst_92 [1] : vector<2x128xf32> to vector<2xf32>
    %396 = vector.shape_cast %395 : vector<2xf32> to vector<2x1xf32>
    %397 = vector.broadcast %396 : vector<2x1xf32> to vector<2x128xf32>
    %398 = arith.subf %394, %397 : vector<2x128xf32>
    %399 = math.exp %398 : vector<2x128xf32>
    %cst_93 = arith.constant dense<0.000000e+00> : vector<2xf32>
    %400 = vector.multi_reduction <add>, %399, %cst_93 [1] : vector<2x128xf32> to vector<2xf32>
    %401 = vector.shape_cast %400 : vector<2xf32> to vector<2x1xf32>
    %402 = math.log %401 : vector<2x1xf32>
    %403 = arith.addf %396, %402 : vector<2x1xf32>
    %c12 = arith.constant 12 : index
    %c0_94 = arith.constant 0 : index
    %404 = vector.load %arg3[%c12, %c0_94] : memref<14x1xi32, #tpu.memory_space<vmem>>, vector<2x1xi32>
    %405 = vector.broadcast %404 : vector<2x1xi32> to vector<2x128xi32>
    %406 = arith.cmpi eq, %28, %405 : vector<2x128xi32>
    %407 = vector.broadcast %403 : vector<2x1xf32> to vector<2x128xf32>
    %408 = arith.subf %394, %407 : vector<2x128xf32>
    %cst_95 = arith.constant 0.000000e+00 : f32
    %409 = vector.broadcast %cst_95 : f32 to vector<2x128xf32>
    %410 = arith.select %406, %408, %409 : vector<2x128xi1>, vector<2x128xf32>
    %cst_96 = arith.constant dense<0.000000e+00> : vector<2xf32>
    %411 = vector.multi_reduction <add>, %410, %cst_96 [1] : vector<2x128xf32> to vector<2xf32>
    %412 = vector.shape_cast %411 : vector<2xf32> to vector<2x1xf32>
    %c0_i32_97 = arith.constant 0 : i32
    %413 = vector.broadcast %c0_i32_97 : i32 to vector<2x1xi32>
    %414 = arith.cmpi ne, %404, %413 : vector<2x1xi32>
    %415 = arith.extui %414 : vector<2x1xi1> to vector<2x1xi32>
    %416 = arith.sitofp %415 : vector<2x1xi32> to vector<2x1xf32>
    %417 = vector.broadcast %396 : vector<2x1xf32> to vector<2x128xf32>
    %418 = arith.cmpf oeq, %394, %417 : vector<2x128xf32>
    %c128_i32_98 = arith.constant 128 : i32
    %419 = vector.broadcast %c128_i32_98 : i32 to vector<2x128xi32>
    %420 = arith.select %418, %28, %419 : vector<2x128xi1>, vector<2x128xi32>
    %cst_99 = arith.constant dense<2147483647> : vector<2xi32>
    %421 = vector.multi_reduction <minsi>, %420, %cst_99 [1] : vector<2x128xi32> to vector<2xi32>
    %422 = vector.shape_cast %421 : vector<2xi32> to vector<2x1xi32>
    %423 = arith.mulf %412, %416 : vector<2x1xf32>
    %424 = arith.subf %367, %423 : vector<2x1xf32>
    %425 = arith.cmpi eq, %422, %404 : vector<2x1xi32>
    %426 = arith.extui %425 : vector<2x1xi1> to vector<2x1xi32>
    %427 = arith.sitofp %426 : vector<2x1xi32> to vector<2x1xf32>
    %428 = arith.mulf %427, %416 : vector<2x1xf32>
    %429 = arith.addf %372, %428 : vector<2x1xf32>
    %430 = arith.addf %373, %416 : vector<2x1xf32>
    %431 = vector.shape_cast %430 : vector<2x1xf32> to vector<1x2x1xf32>
    %cst_100 = arith.constant dense<0.000000e+00> : vector<1xf32>
    %432 = vector.multi_reduction <add>, %431, %cst_100 [1, 2] : vector<1x2x1xf32> to vector<1xf32>
    %433 = vector.shape_cast %432 : vector<1xf32> to vector<1x1x1xf32>
    %434 = vector.extract %433[0, 0, 0] : f32 from vector<1x1x1xf32>
    %cst_101 = arith.constant 1.000000e+00 : f32
    %435 = arith.maximumf %434, %cst_101 : f32
    %436 = vector.shape_cast %424 : vector<2x1xf32> to vector<1x2x1xf32>
    %cst_102 = arith.constant dense<0.000000e+00> : vector<1xf32>
    %437 = vector.multi_reduction <add>, %436, %cst_102 [1, 2] : vector<1x2x1xf32> to vector<1xf32>
    %438 = vector.shape_cast %437 : vector<1xf32> to vector<1x1x1xf32>
    %439 = vector.extract %438[0, 0, 0] : f32 from vector<1x1x1xf32>
    %440 = arith.divf %439, %435 : f32
    %c0_103 = arith.constant 0 : index
    %441 = memref.load %arg6[%c0_103] : memref<2xf32, #tpu.memory_space<smem>>
    memref.store %440, %arg6[%c0_103] : memref<2xf32, #tpu.memory_space<smem>>
    %442 = vector.shape_cast %429 : vector<2x1xf32> to vector<1x2x1xf32>
    %cst_104 = arith.constant dense<0.000000e+00> : vector<1xf32>
    %443 = vector.multi_reduction <add>, %442, %cst_104 [1, 2] : vector<1x2x1xf32> to vector<1xf32>
    %444 = vector.shape_cast %443 : vector<1xf32> to vector<1x1x1xf32>
    %445 = vector.extract %444[0, 0, 0] : f32 from vector<1x1x1xf32>
    %446 = arith.divf %445, %435 : f32
    %c1_105 = arith.constant 1 : index
    %447 = memref.load %arg6[%c1_105] : memref<2xf32, #tpu.memory_space<smem>>
    memref.store %446, %arg6[%c1_105] : memref<2xf32, #tpu.memory_space<smem>>
    return
  }
}

</mosaic_0001>

<llo_original>
// kernel: forward.1
$region0: #{forward.1}
  #allocation0 [shape = 'u32[]', space=smem, size = 0x4, offset = 0x4, fixed_abs, tag = 'smem constant byte address 0x4 - core index']
  #allocation1 [shape = 'u32[144,128]{1,0:T(1,128)}', space=vmem, size = 0x12000, scoped, tag = 'internal scratch']
  %s0 = inlined_call_operand.vmem [shape: f32[2,8,32], index: 0, kind: input, shape index: {}]
  %s1 = inlined_call_operand.vmem [shape: f32[2,8], index: 1, kind: input, shape index: {}]
  %s2 = inlined_call_operand.vmem [shape: f32[14,32], index: 2, kind: input, shape index: {}]
  %s3 = inlined_call_operand.vmem [shape: s32[14,1], index: 3, kind: input, shape index: {}]
  %s4 = inlined_call_operand.vmem [shape: f32[32,512], index: 4, kind: input, shape index: {}]
  %s5 = inlined_call_operand.vmem [shape: f32[3,128], index: 5, kind: input, shape index: {}]
  %s6 = inlined_call_operand.vmem [shape: f32[2], index: 6, kind: output, shape index: {}]
  %s7 = sld [smem:[#allocation0]]
  $region34: #{forward.1} parent=0
    _
  %s9 = ssub.s32 1, %s7
  %s10 = scalar_select 0, %s9, %s7
  $region1: #{forward.1} parent=0
    #allocation2 [shape = 'u8[512]{0}', space=smem, size = 0x200, scoped, tag = 'output window, operand 0, single buffered']
    #allocation3 [shape = 's32[1]{0}', space=sflag, size = 0x4, scoped, tag = 'scoped memory for forward.1']
    %11 = vsyncpa [#allocation3], 0
    // Predicated region
    $region2: #{forward.1} parent=1 // pred_check
      _
    $region3: #{forward.1} parent=1 // pred_check_branch
      %13 = sbr.rel (0) target = $region5
    $region4: #{forward.1} parent=1 // pred_region
      _
    $region5: #{forward.1} parent=1 // pred_fallthru
      _
    // Predicated region
    $region6: #{forward.1} parent=1 // pred_check
      _
    $region7: #{forward.1} parent=1 // pred_check_branch
      %15 = sbr.rel (0) target = $region9
    $region8: #{forward.1} parent=1 // pred_region
      _
    $region9: #{forward.1} parent=1 // pred_fallthru
      _
    // Predicated region
    $region10: #{forward.1} parent=1 // pred_check
      _
    $region11: #{forward.1} parent=1 // pred_check_branch
      %17 = sbr.rel (0) target = $region13
    $region12: #{forward.1} parent=1 // pred_region
      _
    $region13: #{forward.1} parent=1 // pred_fallthru
      _
    // Predicated region
    $region14: #{forward.1} parent=1 // pred_check
      _
    $region15: #{forward.1} parent=1 // pred_check_branch
      %19 = sbr.rel (0) target = $region17
    $region16: #{forward.1} parent=1 // pred_region
      _
    $region17: #{forward.1} parent=1 // pred_fallthru
      _
    // Predicated region
    $region18: #{forward.1} parent=1 // pred_check
      _
    $region19: #{forward.1} parent=1 // pred_check_branch
      %21 = sbr.rel (0) target = $region21
    $region20: #{forward.1} parent=1 // pred_region
      _
    $region21: #{forward.1} parent=1 // pred_fallthru
      _
    // Predicated region
    $region22: #{forward.1} parent=1 // pred_check
      _
    $region23: #{forward.1} parent=1 // pred_check_branch
      %23 = sbr.rel (0) target = $region25
    $region24: #{forward.1} parent=1 // pred_region
      _
    $region25: #{forward.1} parent=1 // pred_fallthru
      _
    %v24 = vld [vmem:[%s4] sm:$0xff]
    %v25 = vld [vmem:[%s4 + $0x20] sm:$0xff]
    %v26 = vld [vmem:[%s4 + $0x40] sm:$0xff]
    %v27 = vld [vmem:[%s4 + $0x60] sm:$0xff]
    %v28 = vld [vmem:[%s4 + $0x8] sm:$0xff]
    %v29 = vld [vmem:[%s4 + $0x28] sm:$0xff]
    %v30 = vld [vmem:[%s4 + $0x48] sm:$0xff]
    %v31 = vld [vmem:[%s4 + $0x68] sm:$0xff]
    %v32 = vld [vmem:[%s4 + $0x10] sm:$0xff]
    %v33 = vld [vmem:[%s4 + $0x30] sm:$0xff]
    %v34 = vld [vmem:[%s4 + $0x50] sm:$0xff]
    %v35 = vld [vmem:[%s4 + $0x70] sm:$0xff]
    %v36 = vld [vmem:[%s4 + $0x18] sm:$0xff]
    %v37 = vld [vmem:[%s4 + $0x38] sm:$0xff]
    %v38 = vld [vmem:[%s4 + $0x58] sm:$0xff]
    %v39 = vld [vmem:[%s4 + $0x78] sm:$0xff]
    %v40 = vld [vmem:[%s5] sm:$0x1]
    %v41 = vld [vmem:[%s5 + $0x1] sm:$0x1]
    %v42 = vld [vmem:[%s5 + $0x2] sm:$0x1]
    %v43 = vld [vmem:[%s0] sm:$0xff]
    %v44 = vld [vmem:[%s0 + $0x8] sm:$0xff]
    %v45 = vld [vmem:[%s1] sm:$0x3]
    %v46 = vlaneseq
    %v47 = vshrl.u32 %v46, 7
    %v48 = vsub.s32 0, %v47
    %v49 = vrot.slane %v45, %v48
    %51 = vbcast.lane.b32.xlu0 %v49, 256
    %v52 = vpop.permute.xlu0 %51
    %v53 = vlaneseq
    %v54 = vshrl.u32 %v53, 7
    %v55 = vsub.s32 1, %v54
    %v56 = vrot.slane %v45, %v55
    %58 = vbcast.lane.b32.xlu0 %v56, 256
    %v59 = vpop.permute.xlu0 %58
    %v60 = vmul.f32 %v43, %v52
    %v61 = vmul.f32 %v44, %v59
    %vm62 = vcmask 261120
    %v63 = vsel %vm62, %v60, 0.0
    %v64 = vrot.slane %v63, 4
    %v65 = vadd.f32 %v63, %v64
    %v66 = vrot.slane %v65, 2
    %v67 = vadd.f32 %v65, %v66
    %v68 = vrot.slane %v67, 1
    %v69 = vadd.f32 %v67, %v68
    %v70 = vsel %vm62, %v61, 0.0
    %v71 = vrot.slane %v70, 4
    %v72 = vadd.f32 %v70, %v71
    %v73 = vrot.slane %v72, 2
    %v74 = vadd.f32 %v72, %v73
    %v75 = vrot.slane %v74, 1
    %v76 = vadd.f32 %v74, %v75
    %vm77 = vcmask 58368
    %v78 = vsel %vm77, %v45, 0.0
    %79 = vadd.xlane.f32.xlu0 %v78
    %v80 = vpop.xlane.xlu0 %79
    %v81 = vmax.f32 %v80, 1.0
    %v83 = vrot.slane %v81, 1
    %v86 = vrcp.pop %v81
    %v87 = vmul.f32 %v69, %v86
    %v88 = vrcp.pop %v83
    %v89 = vmul.f32 %v76, %v88
    %v90 = vlaneseq
    %v91 = vshrl.u32 %v90, 7
    %v92 = vsub.s32 0, %v91
    %v93 = vrot.slane %v40, %v92
    %v96 = vrot.slane %v89, 7
    %vm97 = vcmask 1041409
    %v98 = vsel %vm97, %v96, %v87
    %v99 = vsel %vm62, %v98, 0
    %101 = vmatprep.subr.mxu0 0.0
    %102 = vmatpush1.msra.mxu0 0.0
    %103 = vmatprep.subr.mxu0 0.0
    %104 = vmatpush1.msra.mxu0 0.0
    %105 = vmatprep.subr.mxu0 0.0
    %106 = vmatpush1.msra.mxu0 0.0
    %107 = vmatprep.subr.mxu0 0.0
    %108 = vmatpush1.msra.mxu0 0.0
    %109 = vmatprep.subr.mxu0 0.0
    %110 = vmatpush1.msra.mxu0 0.0
    %111 = vmatprep.subr.mxu0 0.0
    %112 = vmatpush1.msra.mxu0 0.0
    %113 = vmatprep.subr.mxu0 0.0
    %114 = vmatpush1.msra.mxu0 0.0
    %115 = vmatprep.subr.mxu0 0.0
    %116 = vmatpush1.msra.mxu0 0.0
    %117 = vmatprep.subr.mxu0 0.0
    %118 = vmatpush1.msra.mxu0 0.0
    %119 = vmatprep.subr.mxu0 0.0
    %120 = vmatpush1.msra.mxu0 0.0
    %121 = vmatprep.subr.mxu0 0.0
    %122 = vmatpush1.msra.mxu0 0.0
    %123 = vmatprep.subr.mxu0 0.0
    %124 = vmatpush1.msra.mxu0 0.0
    %125 = vmatprep.subr.mxu0 0.0
    %126 = vmatpush1.msra.mxu0 %v27
    %127 = vmatprep.subr.mxu0 0.0
    %128 = vmatpush1.msra.mxu0 %v26
    %129 = vmatprep.subr.mxu0 0.0
    %130 = vmatpush1.msra.mxu0 %v25
    %131 = vmatprep.subr.mxu0 0.0
    %132 = vmatpush1.msra.mxu0 %v24
    %133 = vmatprep.subr.mxu0 0.0
    %134 = vmatpush2.msra.mxu0 0.0
    %135 = vmatprep.subr.mxu0 0.0
    %136 = vmatpush2.msra.mxu0 0.0
    %137 = vmatprep.subr.mxu0 0.0
    %138 = vmatpush2.msra.mxu0 0.0
    %139 = vmatprep.subr.mxu0 0.0
    %140 = vmatpush2.msra.mxu0 0.0
    %141 = vmatprep.subr.mxu0 0.0
    %142 = vmatpush2.msra.mxu0 0.0
    %143 = vmatprep.subr.mxu0 0.0
    %144 = vmatpush2.msra.mxu0 0.0
    %145 = vmatprep.subr.mxu0 0.0
    %146 = vmatpush2.msra.mxu0 0.0
    %147 = vmatprep.subr.mxu0 0.0
    %148 = vmatpush2.msra.mxu0 0.0
    %149 = vmatprep.subr.mxu0 0.0
    %150 = vmatpush2.msra.mxu0 0.0
    %151 = vmatprep.subr.mxu0 0.0
    %152 = vmatpush2.msra.mxu0 0.0
    %153 = vmatprep.subr.mxu0 0.0
    %154 = vmatpush2.msra.mxu0 0.0
    %155 = vmatprep.subr.mxu0 0.0
    %156 = vmatpush2.msra.mxu0 0.0
    %157 = vmatprep.subr.mxu0 0.0
    %158 = vmatpush2.msra.mxu0 0.0
    %159 = vmatprep.subr.mxu0 0.0
    %160 = vmatpush2.msra.mxu0 0.0
    %161 = vmatprep.subr.mxu0 0.0
    %162 = vmatpush2.msra.mxu0 0.0
    %163 = vmatprep.subr.mxu0 0.0
    %164 = vmatpush2.msra.mxu0 0.0
    %165 = vmatprep.mubr.f32.mxu0 0.0
    %166 = vmatmul.mubr.f32.gmra.mxu0 %v99
    %v167 = vpop.f32.mrf.mxu0
    %v168 = vadd.f32 %v93, %v167
    %v169 = vpop.f32.mrf.mxu0
    %170 = vdwg.mxu0
    %v171 = vtanh.pop %v168
    %v172 = vld [vmem:[%s2] sm:$0xff]
    %v173 = vld [vmem:[%s2 + $0x8] sm:$0x3f]
    %v174 = vlaneseq
    %v175 = vshrl.u32 %v174, 7
    %v176 = vsub.s32 0, %v175
    %v177 = vrot.slane %v41, %v176
    %v179 = vsel %vm62, %v172, 0
    %v182 = vsel %vm62, %v173, 0
    %184 = vmatprep.subr.mxu0 0.0
    %185 = vmatpush1.msra.mxu0 0.0
    %186 = vmatprep.subr.mxu0 0.0
    %187 = vmatpush1.msra.mxu0 0.0
    %188 = vmatprep.subr.mxu0 0.0
    %189 = vmatpush1.msra.mxu0 0.0
    %190 = vmatprep.subr.mxu0 0.0
    %191 = vmatpush1.msra.mxu0 0.0
    %192 = vmatprep.subr.mxu0 0.0
    %193 = vmatpush1.msra.mxu0 0.0
    %194 = vmatprep.subr.mxu0 0.0
    %195 = vmatpush1.msra.mxu0 0.0
    %196 = vmatprep.subr.mxu0 0.0
    %197 = vmatpush1.msra.mxu0 0.0
    %198 = vmatprep.subr.mxu0 0.0
    %199 = vmatpush1.msra.mxu0 0.0
    %200 = vmatprep.subr.mxu0 0.0
    %201 = vmatpush1.msra.mxu0 0.0
    %202 = vmatprep.subr.mxu0 0.0
    %203 = vmatpush1.msra.mxu0 0.0
    %204 = vmatprep.subr.mxu0 0.0
    %205 = vmatpush1.msra.mxu0 0.0
    %206 = vmatprep.subr.mxu0 0.0
    %207 = vmatpush1.msra.mxu0 0.0
    %208 = vmatprep.subr.mxu0 0.0
    %209 = vmatpush1.msra.mxu0 %v31
    %210 = vmatprep.subr.mxu0 0.0
    %211 = vmatpush1.msra.mxu0 %v30
    %212 = vmatprep.subr.mxu0 0.0
    %213 = vmatpush1.msra.mxu0 %v29
    %214 = vmatprep.subr.mxu0 0.0
    %215 = vmatpush1.msra.mxu0 %v28
    %216 = vmatprep.subr.mxu0 0.0
    %217 = vmatpush2.msra.mxu0 0.0
    %218 = vmatprep.subr.mxu0 0.0
    %219 = vmatpush2.msra.mxu0 0.0
    %220 = vmatprep.subr.mxu0 0.0
    %221 = vmatpush2.msra.mxu0 0.0
    %222 = vmatprep.subr.mxu0 0.0
    %223 = vmatpush2.msra.mxu0 0.0
    %224 = vmatprep.subr.mxu0 0.0
    %225 = vmatpush2.msra.mxu0 0.0
    %226 = vmatprep.subr.mxu0 0.0
    %227 = vmatpush2.msra.mxu0 0.0
    %228 = vmatprep.subr.mxu0 0.0
    %229 = vmatpush2.msra.mxu0 0.0
    %230 = vmatprep.subr.mxu0 0.0
    %231 = vmatpush2.msra.mxu0 0.0
    %232 = vmatprep.subr.mxu0 0.0
    %233 = vmatpush2.msra.mxu0 0.0
    %234 = vmatprep.subr.mxu0 0.0
    %235 = vmatpush2.msra.mxu0 0.0
    %236 = vmatprep.subr.mxu0 0.0
    %237 = vmatpush2.msra.mxu0 0.0
    %238 = vmatprep.subr.mxu0 0.0
    %239 = vmatpush2.msra.mxu0 0.0
    %240 = vmatprep.subr.mxu0 0.0
    %241 = vmatpush2.msra.mxu0 0.0
    %242 = vmatprep.subr.mxu0 0.0
    %243 = vmatpush2.msra.mxu0 0.0
    %244 = vmatprep.subr.mxu0 0.0
    %245 = vmatpush2.msra.mxu0 0.0
    %246 = vmatprep.subr.mxu0 0.0
    %247 = vmatpush2.msra.mxu0 0.0
    %248 = vmatprep.mubr.f32.mxu0 0.0
    %249 = vmatmul.mubr.f32.gmra.mxu0 %v179
    %v250 = vpop.f32.mrf.mxu0
    %v251 = vadd.f32 %v177, %v250
    %v252 = vpop.f32.mrf.mxu0
    %253 = vmatprep.mubr.f32.mxu0 0.0
    %254 = vmatmul.mubr.f32.gmra.mxu0 %v182
    %v255 = vpop.f32.mrf.mxu0
    %v256 = vadd.f32 %v177, %v255
    %v257 = vpop.f32.mrf.mxu0
    %258 = vdwg.mxu0
    %v259 = vlaneseq
    %v260 = vand.u32 %v259, 127
    %v262 = vsel %vm62, %v171, 0
    %264 = vmatprep.subr.mxu0 0.0
    %265 = vmatpush1.msra.mxu0 0.0
    %266 = vmatprep.subr.mxu0 0.0
    %267 = vmatpush1.msra.mxu0 0.0
    %268 = vmatprep.subr.mxu0 0.0
    %269 = vmatpush1.msra.mxu0 0.0
    %270 = vmatprep.subr.mxu0 0.0
    %271 = vmatpush1.msra.mxu0 0.0
    %272 = vmatprep.subr.mxu0 0.0
    %273 = vmatpush1.msra.mxu0 0.0
    %274 = vmatprep.subr.mxu0 0.0
    %275 = vmatpush1.msra.mxu0 0.0
    %276 = vmatprep.subr.mxu0 0.0
    %277 = vmatpush1.msra.mxu0 0.0
    %278 = vmatprep.subr.mxu0 0.0
    %279 = vmatpush1.msra.mxu0 0.0
    %280 = vmatprep.subr.mxu0 0.0
    %281 = vmatpush1.msra.mxu0 0.0
    %282 = vmatprep.subr.mxu0 0.0
    %283 = vmatpush1.msra.mxu0 0.0
    %284 = vmatprep.subr.mxu0 0.0
    %285 = vmatpush1.msra.mxu0 0.0
    %286 = vmatprep.subr.mxu0 0.0
    %287 = vmatpush1.msra.mxu0 0.0
    %288 = vmatprep.subr.mxu0 0.0
    %289 = vmatpush1.msra.mxu0 %v35
    %290 = vmatprep.subr.mxu0 0.0
    %291 = vmatpush1.msra.mxu0 %v34
    %292 = vmatprep.subr.mxu0 0.0
    %293 = vmatpush1.msra.mxu0 %v33
    %294 = vmatprep.subr.mxu0 0.0
    %295 = vmatpush1.msra.mxu0 %v32
    %296 = vmatprep.subr.mxu0 0.0
    %297 = vmatpush2.msra.mxu0 0.0
    %298 = vmatprep.subr.mxu0 0.0
    %299 = vmatpush2.msra.mxu0 0.0
    %300 = vmatprep.subr.mxu0 0.0
    %301 = vmatpush2.msra.mxu0 0.0
    %302 = vmatprep.subr.mxu0 0.0
    %303 = vmatpush2.msra.mxu0 0.0
    %304 = vmatprep.subr.mxu0 0.0
    %305 = vmatpush2.msra.mxu0 0.0
    %306 = vmatprep.subr.mxu0 0.0
    %307 = vmatpush2.msra.mxu0 0.0
    %308 = vmatprep.subr.mxu0 0.0
    %309 = vmatpush2.msra.mxu0 0.0
    %310 = vmatprep.subr.mxu0 0.0
    %311 = vmatpush2.msra.mxu0 0.0
    %312 = vmatprep.subr.mxu0 0.0
    %313 = vmatpush2.msra.mxu0 0.0
    %314 = vmatprep.subr.mxu0 0.0
    %315 = vmatpush2.msra.mxu0 0.0
    %316 = vmatprep.subr.mxu0 0.0
    %317 = vmatpush2.msra.mxu0 0.0
    %318 = vmatprep.subr.mxu0 0.0
    %319 = vmatpush2.msra.mxu0 0.0
    %320 = vmatprep.subr.mxu0 0.0
    %321 = vmatpush2.msra.mxu0 0.0
    %322 = vmatprep.subr.mxu0 0.0
    %323 = vmatpush2.msra.mxu0 0.0
    %324 = vmatprep.subr.mxu0 0.0
    %325 = vmatpush2.msra.mxu0 0.0
    %326 = vmatprep.subr.mxu0 0.0
    %327 = vmatpush2.msra.mxu0 0.0
    %328 = vmatprep.mubr.f32.mxu0 0.0
    %329 = vmatmul.mubr.f32.gmra.mxu0 %v262
    %v330 = vpop.f32.mrf.mxu0
    %v331 = vadd.f32 0.0, %v330
    %v332 = vpop.f32.mrf.mxu0
    %333 = vdwg.mxu0
    %v334 = vadd.f32 %v251, %v331
    %v335 = vxor.u32 %v334, 2147483648
    %v336 = vmul.f32 %v335, 1.442695
    %v337 = vpow.pop %v336
    %v338 = vadd.f32 %v337, 1.0
    %v339 = vrcp.pop %v338
    %v340 = vmul.f32 1.0, %v339
    %v341 = vtanh.pop %v334
    %v342 = vmul.f32 %v340, 0.0
    %344 = vrot.lane.b32.xlu0 %v341, 64
    %v345 = vpop.permute.xlu0 %344
    %v347 = vmul.f32 %v340, %v345
    %349 = vrot.lane.b32.xlu0 %v347, 32
    %v350 = vpop.permute.xlu0 %349
    %v352 = vadd.f32 %v342, %v350
    %v353 = vtanh.pop %v352
    %355 = vrot.lane.b32.xlu0 %v353, 64
    %v356 = vpop.permute.xlu0 %355
    %v358 = vmul.f32 %v340, %v356
    %v359 = vlaneseq
    %v360 = vshrl.u32 %v359, 7
    %v361 = vsub.s32 0, %v360
    %v362 = vrot.slane %v42, %v361
    %364 = vrot.lane.b32.xlu0 %v358, 32
    %v365 = vpop.permute.xlu0 %364
    %v366 = vsel %vm62, %v365, 0
    %368 = vmatprep.subr.mxu0 0.0
    %369 = vmatpush1.msra.mxu0 0.0
    %370 = vmatprep.subr.mxu0 0.0
    %371 = vmatpush1.msra.mxu0 0.0
    %372 = vmatprep.subr.mxu0 0.0
    %373 = vmatpush1.msra.mxu0 0.0
    %374 = vmatprep.subr.mxu0 0.0
    %375 = vmatpush1.msra.mxu0 0.0
    %376 = vmatprep.subr.mxu0 0.0
    %377 = vmatpush1.msra.mxu0 0.0
    %378 = vmatprep.subr.mxu0 0.0
    %379 = vmatpush1.msra.mxu0 0.0
    %380 = vmatprep.subr.mxu0 0.0
    %381 = vmatpush1.msra.mxu0 0.0
    %382 = vmatprep.subr.mxu0 0.0
    %383 = vmatpush1.msra.mxu0 0.0
    %384 = vmatprep.subr.mxu0 0.0
    %385 = vmatpush1.msra.mxu0 0.0
    %386 = vmatprep.subr.mxu0 0.0
    %387 = vmatpush1.msra.mxu0 0.0
    %388 = vmatprep.subr.mxu0 0.0
    %389 = vmatpush1.msra.mxu0 0.0
    %390 = vmatprep.subr.mxu0 0.0
    %391 = vmatpush1.msra.mxu0 0.0
    %392 = vmatprep.subr.mxu0 0.0
    %393 = vmatpush1.msra.mxu0 %v39
    %394 = vmatprep.subr.mxu0 0.0
    %395 = vmatpush1.msra.mxu0 %v38
    %396 = vmatprep.subr.mxu0 0.0
    %397 = vmatpush1.msra.mxu0 %v37
    %398 = vmatprep.subr.mxu0 0.0
    %399 = vmatpush1.msra.mxu0 %v36
    %400 = vmatprep.subr.mxu0 0.0
    %401 = vmatpush2.msra.mxu0 0.0
    %402 = vmatprep.subr.mxu0 0.0
    %403 = vmatpush2.msra.mxu0 0.0
    %404 = vmatprep.subr.mxu0 0.0
    %405 = vmatpush2.msra.mxu0 0.0
    %406 = vmatprep.subr.mxu0 0.0
    %407 = vmatpush2.msra.mxu0 0.0
    %408 = vmatprep.subr.mxu0 0.0
    %409 = vmatpush2.msra.mxu0 0.0
    %410 = vmatprep.subr.mxu0 0.0
    %411 = vmatpush2.msra.mxu0 0.0
    %412 = vmatprep.subr.mxu0 0.0
    %413 = vmatpush2.msra.mxu0 0.0
    %414 = vmatprep.subr.mxu0 0.0
    %415 = vmatpush2.msra.mxu0 0.0
    %416 = vmatprep.subr.mxu0 0.0
    %417 = vmatpush2.msra.mxu0 0.0
    %418 = vmatprep.subr.mxu0 0.0
    %419 = vmatpush2.msra.mxu0 0.0
    %420 = vmatprep.subr.mxu0 0.0
    %421 = vmatpush2.msra.mxu0 0.0
    %422 = vmatprep.subr.mxu0 0.0
    %423 = vmatpush2.msra.mxu0 0.0
    %424 = vmatprep.subr.mxu0 0.0
    %425 = vmatpush2.msra.mxu0 0.0
    %426 = vmatprep.subr.mxu0 0.0
    %427 = vmatpush2.msra.mxu0 0.0
    %428 = vmatprep.subr.mxu0 0.0
    %429 = vmatpush2.msra.mxu0 0.0
    %430 = vmatprep.subr.mxu0 0.0
    %431 = vmatpush2.msra.mxu0 0.0
    %432 = vmatprep.mubr.f32.mxu0 0.0
    %433 = vmatmul.mubr.f32.gmra.mxu0 %v366
    %v434 = vpop.f32.mrf.mxu0
    %v435 = vadd.f32 %v362, %v434
    %v436 = vpop.f32.mrf.mxu0
    %437 = vdwg.mxu0
    %vm438 = vcmask 1041408
    %v439 = vsel %vm438, %v435, -inf
    %440 = vmax.xlane.f32.xlu0 %v439
    %v441 = vpop.xlane.xlu0 %440
    %v442 = vsub.f32 %v435, %v441
    %v443 = vmul.f32 %v442, 1.442695
    %v444 = vpow.pop %v443
    %v445 = vsel %vm438, %v444, 0.0
    %446 = vadd.xlane.f32.xlu0 %v445
    %v447 = vpop.xlane.xlu0 %446
    %v448 = vlog2.pop %v447
    %v449 = vmul.f32 %v448, 0.6931472
    %v450 = vadd.f32 %v441, %v449
    %v451 = vld [vmem:[%s3] sm:$0x3]
    %452 = vset.pattern.permute.xlu0 0
    %453 = vperm.xlu0 %452, %v451
    %v454 = vpop.permute.xlu0 %453
    %vm455 = vcmp.eq.s32.totalorder %v260, %v454
    %v456 = vsub.f32 %v435, %v450
    %v457 = vsel %vm455, %v456, 0.0
    %v458 = vsel %vm438, %v457, 0.0
    %459 = vadd.xlane.f32.xlu0 %v458
    %v460 = vpop.xlane.xlu0 %459
    %vm461 = vcmp.ne.s32.totalorder %v451, 0
    %v462 = vsel %vm461, 1, 0
    %v463 = vcvt.s32.f32 %v462
    %vm464 = vcmp.eq.f32.partialorder %v435, %v441
    %v465 = vsel %vm464, %v260, 128
    %v466 = vsel %vm438, %v465, 2147483647
    %v467 = vand.u32 %v466, 65535
    %v468 = vshra.s32 %v466, 16
    %v469 = vcvt.s32.f32 %v467
    %v470 = vcvt.s32.f32 %v468
    %471 = vmin.xlane.f32.xlu0 %v470
    %v472 = vpop.xlane.xlu0 %471
    %vm473 = vcmp.eq.f32.partialorder %v470, %v472
    %v474 = vsel %vm473, %v469, inf
    %475 = vmin.xlane.f32.xlu0 %v474
    %v476 = vpop.xlane.xlu0 %475
    %v477 = vcvt.f32.s32 %v476
    %v478 = vcvt.f32.s32 %v472
    %v479 = vshll.u32 %v478, 16
    %v480 = vadd.s32 %v479, %v477
    %v481 = vmul.f32 %v460, %v463
    %v482 = vsub.f32 0.0, %v481
    %vm483 = vcmp.eq.s32.totalorder %v480, %v451
    %v484 = vsel %vm483, 1, 0
    %v485 = vcvt.s32.f32 %v484
    %v486 = vmul.f32 %v485, %v463
    %v487 = vadd.f32 %v486, 0.0
    %v488 = vadd.f32 %v463, 0.0
    %489 = vmatprep.subr.mxu0 0.0
    %490 = vmatpush1.msra.mxu0 0.0
    %491 = vmatprep.subr.mxu0 0.0
    %492 = vmatpush1.msra.mxu0 0.0
    %493 = vmatprep.subr.mxu0 0.0
    %494 = vmatpush1.msra.mxu0 0.0
    %495 = vmatprep.subr.mxu0 0.0
    %496 = vmatpush1.msra.mxu0 0.0
    %497 = vmatprep.subr.mxu0 0.0
    %498 = vmatpush1.msra.mxu0 0.0
    %499 = vmatprep.subr.mxu0 0.0
    %500 = vmatpush1.msra.mxu0 0.0
    %501 = vmatprep.subr.mxu0 0.0
    %502 = vmatpush1.msra.mxu0 0.0
    %503 = vmatprep.subr.mxu0 0.0
    %504 = vmatpush1.msra.mxu0 0.0
    %505 = vmatprep.subr.mxu0 0.0
    %506 = vmatpush1.msra.mxu0 0.0
    %507 = vmatprep.subr.mxu0 0.0
    %508 = vmatpush1.msra.mxu0 0.0
    %509 = vmatprep.subr.mxu0 0.0
    %510 = vmatpush1.msra.mxu0 0.0
    %511 = vmatprep.subr.mxu0 0.0
    %512 = vmatpush1.msra.mxu0 0.0
    %513 = vmatprep.subr.mxu0 0.0
    %514 = vmatpush1.msra.mxu0 %v35
    %515 = vmatprep.subr.mxu0 0.0
    %516 = vmatpush1.msra.mxu0 %v34
    %517 = vmatprep.subr.mxu0 0.0
    %518 = vmatpush1.msra.mxu0 %v33
    %519 = vmatprep.subr.mxu0 0.0
    %520 = vmatpush1.msra.mxu0 %v32
    %521 = vmatprep.subr.mxu0 0.0
    %522 = vmatpush2.msra.mxu0 0.0
    %523 = vmatprep.subr.mxu0 0.0
    %524 = vmatpush2.msra.mxu0 0.0
    %525 = vmatprep.subr.mxu0 0.0
    %526 = vmatpush2.msra.mxu0 0.0
    %527 = vmatprep.subr.mxu0 0.0
    %528 = vmatpush2.msra.mxu0 0.0
    %529 = vmatprep.subr.mxu0 0.0
    %530 = vmatpush2.msra.mxu0 0.0
    %531 = vmatprep.subr.mxu0 0.0
    %532 = vmatpush2.msra.mxu0 0.0
    %533 = vmatprep.subr.mxu0 0.0
    %534 = vmatpush2.msra.mxu0 0.0
    %535 = vmatprep.subr.mxu0 0.0
    %536 = vmatpush2.msra.mxu0 0.0
    %537 = vmatprep.subr.mxu0 0.0
    %538 = vmatpush2.msra.mxu0 0.0
    %539 = vmatprep.subr.mxu0 0.0
    %540 = vmatpush2.msra.mxu0 0.0
    %541 = vmatprep.subr.mxu0 0.0
    %542 = vmatpush2.msra.mxu0 0.0
    %543 = vmatprep.subr.mxu0 0.0
    %544 = vmatpush2.msra.mxu0 0.0
    %545 = vmatprep.subr.mxu0 0.0
    %546 = vmatpush2.msra.mxu0 0.0
    %547 = vmatprep.subr.mxu0 0.0
    %548 = vmatpush2.msra.mxu0 0.0
    %549 = vmatprep.subr.mxu0 0.0
    %550 = vmatpush2.msra.mxu0 0.0
    %551 = vmatprep.subr.mxu0 0.0
    %552 = vmatpush2.msra.mxu0 0.0
    %553 = vmatprep.mubr.f32.mxu0 0.0
    %554 = vmatmul.mubr.f32.gmra.mxu0 %v366
    %v555 = vpop.f32.mrf.mxu0
    %v556 = vadd.f32 0.0, %v555
    %v557 = vpop.f32.mrf.mxu0
    %558 = vdwg.mxu0
    %v560 = vrot.slane %v556, 6
    %v562 = vadd.f32 %v251, %v560
    %v563 = vxor.u32 %v562, 2147483648
    %v564 = vmul.f32 %v563, 1.442695
    %v565 = vpow.pop %v564
    %v566 = vadd.f32 %v565, 1.0
    %v567 = vrcp.pop %v566
    %v568 = vmul.f32 1.0, %v567
    %v569 = vtanh.pop %v562
    %v571 = vrot.slane %v352, 6
    %v573 = vmul.f32 %v568, %v571
    %575 = vrot.lane.b32.xlu0 %v569, 64
    %v576 = vpop.permute.xlu0 %575
    %v578 = vmul.f32 %v568, %v576
    %580 = vrot.lane.b32.xlu0 %v578, 32
    %v581 = vpop.permute.xlu0 %580
    %v583 = vadd.f32 %v573, %v581
    %v584 = vtanh.pop %v583
    %586 = vrot.lane.b32.xlu0 %v584, 64
    %v587 = vpop.permute.xlu0 %586
    %v589 = vmul.f32 %v568, %v587
    %v591 = vrot.slane %v589, 2
    %592 = vrot.lane.b32.xlu0 %v591, 32
    %v593 = vpop.permute.xlu0 %592
    %v594 = vsel %vm62, %v593, 0
    %596 = vmatprep.subr.mxu0 0.0
    %597 = vmatpush1.msra.mxu0 0.0
    %598 = vmatprep.subr.mxu0 0.0
    %599 = vmatpush1.msra.mxu0 0.0
    %600 = vmatprep.subr.mxu0 0.0
    %601 = vmatpush1.msra.mxu0 0.0
    %602 = vmatprep.subr.mxu0 0.0
    %603 = vmatpush1.msra.mxu0 0.0
    %604 = vmatprep.subr.mxu0 0.0
    %605 = vmatpush1.msra.mxu0 0.0
    %606 = vmatprep.subr.mxu0 0.0
    %607 = vmatpush1.msra.mxu0 0.0
    %608 = vmatprep.subr.mxu0 0.0
    %609 = vmatpush1.msra.mxu0 0.0
    %610 = vmatprep.subr.mxu0 0.0
    %611 = vmatpush1.msra.mxu0 0.0
    %612 = vmatprep.subr.mxu0 0.0
    %613 = vmatpush1.msra.mxu0 0.0
    %614 = vmatprep.subr.mxu0 0.0
    %615 = vmatpush1.msra.mxu0 0.0
    %616 = vmatprep.subr.mxu0 0.0
    %617 = vmatpush1.msra.mxu0 0.0
    %618 = vmatprep.subr.mxu0 0.0
    %619 = vmatpush1.msra.mxu0 0.0
    %620 = vmatprep.subr.mxu0 0.0
    %621 = vmatpush1.msra.mxu0 %v39
    %622 = vmatprep.subr.mxu0 0.0
    %623 = vmatpush1.msra.mxu0 %v38
    %624 = vmatprep.subr.mxu0 0.0
    %625 = vmatpush1.msra.mxu0 %v37
    %626 = vmatprep.subr.mxu0 0.0
    %627 = vmatpush1.msra.mxu0 %v36
    %628 = vmatprep.subr.mxu0 0.0
    %629 = vmatpush2.msra.mxu0 0.0
    %630 = vmatprep.subr.mxu0 0.0
    %631 = vmatpush2.msra.mxu0 0.0
    %632 = vmatprep.subr.mxu0 0.0
    %633 = vmatpush2.msra.mxu0 0.0
    %634 = vmatprep.subr.mxu0 0.0
    %635 = vmatpush2.msra.mxu0 0.0
    %636 = vmatprep.subr.mxu0 0.0
    %637 = vmatpush2.msra.mxu0 0.0
    %638 = vmatprep.subr.mxu0 0.0
    %639 = vmatpush2.msra.mxu0 0.0
    %640 = vmatprep.subr.mxu0 0.0
    %641 = vmatpush2.msra.mxu0 0.0
    %642 = vmatprep.subr.mxu0 0.0
    %643 = vmatpush2.msra.mxu0 0.0
    %644 = vmatprep.subr.mxu0 0.0
    %645 = vmatpush2.msra.mxu0 0.0
    %646 = vmatprep.subr.mxu0 0.0
    %647 = vmatpush2.msra.mxu0 0.0
    %648 = vmatprep.subr.mxu0 0.0
    %649 = vmatpush2.msra.mxu0 0.0
    %650 = vmatprep.subr.mxu0 0.0
    %651 = vmatpush2.msra.mxu0 0.0
    %652 = vmatprep.subr.mxu0 0.0
    %653 = vmatpush2.msra.mxu0 0.0
    %654 = vmatprep.subr.mxu0 0.0
    %655 = vmatpush2.msra.mxu0 0.0
    %656 = vmatprep.subr.mxu0 0.0
    %657 = vmatpush2.msra.mxu0 0.0
    %658 = vmatprep.subr.mxu0 0.0
    %659 = vmatpush2.msra.mxu0 0.0
    %660 = vmatprep.mubr.f32.mxu0 0.0
    %661 = vmatmul.mubr.f32.gmra.mxu0 %v594
    %v662 = vpop.f32.mrf.mxu0
    %v663 = vadd.f32 %v362, %v662
    %v664 = vpop.f32.mrf.mxu0
    %665 = vdwg.mxu0
    %v666 = vsel %vm438, %v663, -inf
    %667 = vmax.xlane.f32.xlu0 %v666
    %v668 = vpop.xlane.xlu0 %667
    %v669 = vsub.f32 %v663, %v668
    %v670 = vmul.f32 %v669, 1.442695
    %v671 = vpow.pop %v670
    %v672 = vsel %vm438, %v671, 0.0
    %673 = vadd.xlane.f32.xlu0 %v672
    %v674 = vpop.xlane.xlu0 %673
    %v675 = vlog2.pop %v674
    %v676 = vmul.f32 %v675, 0.6931472
    %v677 = vadd.f32 %v668, %v676
    %v678 = vld [vmem:[%s3 + $0x2] sm:$0x3]
    %679 = vset.pattern.permute.xlu0 0
    %680 = vperm.xlu0 %679, %v678
    %v681 = vpop.permute.xlu0 %680
    %vm682 = vcmp.eq.s32.totalorder %v260, %v681
    %v683 = vsub.f32 %v663, %v677
    %v684 = vsel %vm682, %v683, 0.0
    %v685 = vsel %vm438, %v684, 0.0
    %686 = vadd.xlane.f32.xlu0 %v685
    %v687 = vpop.xlane.xlu0 %686
    %vm688 = vcmp.ne.s32.totalorder %v678, 0
    %v689 = vsel %vm688, 1, 0
    %v690 = vcvt.s32.f32 %v689
    %vm691 = vcmp.eq.f32.partialorder %v663, %v668
    %v692 = vsel %vm691, %v260, 128
    %v693 = vsel %vm438, %v692, 2147483647
    %v694 = vand.u32 %v693, 65535
    %v695 = vshra.s32 %v693, 16
    %v696 = vcvt.s32.f32 %v694
    %v697 = vcvt.s32.f32 %v695
    %698 = vmin.xlane.f32.xlu0 %v697
    %v699 = vpop.xlane.xlu0 %698
    %vm700 = vcmp.eq.f32.partialorder %v697, %v699
    %v701 = vsel %vm700, %v696, inf
    %702 = vmin.xlane.f32.xlu0 %v701
    %v703 = vpop.xlane.xlu0 %702
    %v704 = vcvt.f32.s32 %v703
    %v705 = vcvt.f32.s32 %v699
    %v706 = vshll.u32 %v705, 16
    %v707 = vadd.s32 %v706, %v704
    %v708 = vmul.f32 %v687, %v690
    %v709 = vsub.f32 %v482, %v708
    %vm710 = vcmp.eq.s32.totalorder %v707, %v678
    %v711 = vsel %vm710, 1, 0
    %v712 = vcvt.s32.f32 %v711
    %v713 = vmul.f32 %v712, %v690
    %v714 = vadd.f32 %v487, %v713
    %v715 = vadd.f32 %v488, %v690
    %716 = vmatprep.subr.mxu0 0.0
    %717 = vmatpush1.msra.mxu0 0.0
    %718 = vmatprep.subr.mxu0 0.0
    %719 = vmatpush1.msra.mxu0 0.0
    %720 = vmatprep.subr.mxu0 0.0
    %721 = vmatpush1.msra.mxu0 0.0
    %722 = vmatprep.subr.mxu0 0.0
    %723 = vmatpush1.msra.mxu0 0.0
    %724 = vmatprep.subr.mxu0 0.0
    %725 = vmatpush1.msra.mxu0 0.0
    %726 = vmatprep.subr.mxu0 0.0
    %727 = vmatpush1.msra.mxu0 0.0
    %728 = vmatprep.subr.mxu0 0.0
    %729 = vmatpush1.msra.mxu0 0.0
    %730 = vmatprep.subr.mxu0 0.0
    %731 = vmatpush1.msra.mxu0 0.0
    %732 = vmatprep.subr.mxu0 0.0
    %733 = vmatpush1.msra.mxu0 0.0
    %734 = vmatprep.subr.mxu0 0.0
    %735 = vmatpush1.msra.mxu0 0.0
    %736 = vmatprep.subr.mxu0 0.0
    %737 = vmatpush1.msra.mxu0 0.0
    %738 = vmatprep.subr.mxu0 0.0
    %739 = vmatpush1.msra.mxu0 0.0
    %740 = vmatprep.subr.mxu0 0.0
    %741 = vmatpush1.msra.mxu0 %v35
    %742 = vmatprep.subr.mxu0 0.0
    %743 = vmatpush1.msra.mxu0 %v34
    %744 = vmatprep.subr.mxu0 0.0
    %745 = vmatpush1.msra.mxu0 %v33
    %746 = vmatprep.subr.mxu0 0.0
    %747 = vmatpush1.msra.mxu0 %v32
    %748 = vmatprep.subr.mxu0 0.0
    %749 = vmatpush2.msra.mxu0 0.0
    %750 = vmatprep.subr.mxu0 0.0
    %751 = vmatpush2.msra.mxu0 0.0
    %752 = vmatprep.subr.mxu0 0.0
    %753 = vmatpush2.msra.mxu0 0.0
    %754 = vmatprep.subr.mxu0 0.0
    %755 = vmatpush2.msra.mxu0 0.0
    %756 = vmatprep.subr.mxu0 0.0
    %757 = vmatpush2.msra.mxu0 0.0
    %758 = vmatprep.subr.mxu0 0.0
    %759 = vmatpush2.msra.mxu0 0.0
    %760 = vmatprep.subr.mxu0 0.0
    %761 = vmatpush2.msra.mxu0 0.0
    %762 = vmatprep.subr.mxu0 0.0
    %763 = vmatpush2.msra.mxu0 0.0
    %764 = vmatprep.subr.mxu0 0.0
    %765 = vmatpush2.msra.mxu0 0.0
    %766 = vmatprep.subr.mxu0 0.0
    %767 = vmatpush2.msra.mxu0 0.0
    %768 = vmatprep.subr.mxu0 0.0
    %769 = vmatpush2.msra.mxu0 0.0
    %770 = vmatprep.subr.mxu0 0.0
    %771 = vmatpush2.msra.mxu0 0.0
    %772 = vmatprep.subr.mxu0 0.0
    %773 = vmatpush2.msra.mxu0 0.0
    %774 = vmatprep.subr.mxu0 0.0
    %775 = vmatpush2.msra.mxu0 0.0
    %776 = vmatprep.subr.mxu0 0.0
    %777 = vmatpush2.msra.mxu0 0.0
    %778 = vmatprep.subr.mxu0 0.0
    %779 = vmatpush2.msra.mxu0 0.0
    %780 = vmatprep.mubr.f32.mxu0 0.0
    %781 = vmatmul.mubr.f32.gmra.mxu0 %v594
    %v782 = vpop.f32.mrf.mxu0
    %v783 = vadd.f32 0.0, %v782
    %v784 = vpop.f32.mrf.mxu0
    %785 = vdwg.mxu0
    %v787 = vrot.slane %v783, 4
    %v789 = vadd.f32 %v251, %v787
    %v790 = vxor.u32 %v789, 2147483648
    %v791 = vmul.f32 %v790, 1.442695
    %v792 = vpow.pop %v791
    %v793 = vadd.f32 %v792, 1.0
    %v794 = vrcp.pop %v793
    %v795 = vmul.f32 1.0, %v794
    %v796 = vtanh.pop %v789
    %v798 = vrot.slane %v583, 6
    %v800 = vmul.f32 %v795, %v798
    %802 = vrot.lane.b32.xlu0 %v796, 64
    %v803 = vpop.permute.xlu0 %802
    %v805 = vmul.f32 %v795, %v803
    %807 = vrot.lane.b32.xlu0 %v805, 32
    %v808 = vpop.permute.xlu0 %807
    %v810 = vadd.f32 %v800, %v808
    %v811 = vtanh.pop %v810
    %813 = vrot.lane.b32.xlu0 %v811, 64
    %v814 = vpop.permute.xlu0 %813
    %v816 = vmul.f32 %v795, %v814
    %v818 = vrot.slane %v816, 4
    %819 = vrot.lane.b32.xlu0 %v818, 32
    %v820 = vpop.permute.xlu0 %819
    %v821 = vsel %vm62, %v820, 0
    %823 = vmatprep.subr.mxu0 0.0
    %824 = vmatpush1.msra.mxu0 0.0
    %825 = vmatprep.subr.mxu0 0.0
    %826 = vmatpush1.msra.mxu0 0.0
    %827 = vmatprep.subr.mxu0 0.0
    %828 = vmatpush1.msra.mxu0 0.0
    %829 = vmatprep.subr.mxu0 0.0
    %830 = vmatpush1.msra.mxu0 0.0
    %831 = vmatprep.subr.mxu0 0.0
    %832 = vmatpush1.msra.mxu0 0.0
    %833 = vmatprep.subr.mxu0 0.0
    %834 = vmatpush1.msra.mxu0 0.0
    %835 = vmatprep.subr.mxu0 0.0
    %836 = vmatpush1.msra.mxu0 0.0
    %837 = vmatprep.subr.mxu0 0.0
    %838 = vmatpush1.msra.mxu0 0.0
    %839 = vmatprep.subr.mxu0 0.0
    %840 = vmatpush1.msra.mxu0 0.0
    %841 = vmatprep.subr.mxu0 0.0
    %842 = vmatpush1.msra.mxu0 0.0
    %843 = vmatprep.subr.mxu0 0.0
    %844 = vmatpush1.msra.mxu0 0.0
    %845 = vmatprep.subr.mxu0 0.0
    %846 = vmatpush1.msra.mxu0 0.0
    %847 = vmatprep.subr.mxu0 0.0
    %848 = vmatpush1.msra.mxu0 %v39
    %849 = vmatprep.subr.mxu0 0.0
    %850 = vmatpush1.msra.mxu0 %v38
    %851 = vmatprep.subr.mxu0 0.0
    %852 = vmatpush1.msra.mxu0 %v37
    %853 = vmatprep.subr.mxu0 0.0
    %854 = vmatpush1.msra.mxu0 %v36
    %855 = vmatprep.subr.mxu0 0.0
    %856 = vmatpush2.msra.mxu0 0.0
    %857 = vmatprep.subr.mxu0 0.0
    %858 = vmatpush2.msra.mxu0 0.0
    %859 = vmatprep.subr.mxu0 0.0
    %860 = vmatpush2.msra.mxu0 0.0
    %861 = vmatprep.subr.mxu0 0.0
    %862 = vmatpush2.msra.mxu0 0.0
    %863 = vmatprep.subr.mxu0 0.0
    %864 = vmatpush2.msra.mxu0 0.0
    %865 = vmatprep.subr.mxu0 0.0
    %866 = vmatpush2.msra.mxu0 0.0
    %867 = vmatprep.subr.mxu0 0.0
    %868 = vmatpush2.msra.mxu0 0.0
    %869 = vmatprep.subr.mxu0 0.0
    %870 = vmatpush2.msra.mxu0 0.0
    %871 = vmatprep.subr.mxu0 0.0
    %872 = vmatpush2.msra.mxu0 0.0
    %873 = vmatprep.subr.mxu0 0.0
    %874 = vmatpush2.msra.mxu0 0.0
    %875 = vmatprep.subr.mxu0 0.0
    %876 = vmatpush2.msra.mxu0 0.0
    %877 = vmatprep.subr.mxu0 0.0
    %878 = vmatpush2.msra.mxu0 0.0
    %879 = vmatprep.subr.mxu0 0.0
    %880 = vmatpush2.msra.mxu0 0.0
    %881 = vmatprep.subr.mxu0 0.0
    %882 = vmatpush2.msra.mxu0 0.0
    %883 = vmatprep.subr.mxu0 0.0
    %884 = vmatpush2.msra.mxu0 0.0
    %885 = vmatprep.subr.mxu0 0.0
    %886 = vmatpush2.msra.mxu0 0.0
    %887 = vmatprep.mubr.f32.mxu0 0.0
    %888 = vmatmul.mubr.f32.gmra.mxu0 %v821
    %v889 = vpop.f32.mrf.mxu0
    %v890 = vadd.f32 %v362, %v889
    %v891 = vpop.f32.mrf.mxu0
    %892 = vdwg.mxu0
    %v893 = vsel %vm438, %v890, -inf
    %894 = vmax.xlane.f32.xlu0 %v893
    %v895 = vpop.xlane.xlu0 %894
    %v896 = vsub.f32 %v890, %v895
    %v897 = vmul.f32 %v896, 1.442695
    %v898 = vpow.pop %v897
    %v899 = vsel %vm438, %v898, 0.0
    %900 = vadd.xlane.f32.xlu0 %v899
    %v901 = vpop.xlane.xlu0 %900
    %v902 = vlog2.pop %v901
    %v903 = vmul.f32 %v902, 0.6931472
    %v904 = vadd.f32 %v895, %v903
    %v905 = vld [vmem:[%s3 + $0x4] sm:$0x3]
    %906 = vset.pattern.permute.xlu0 0
    %907 = vperm.xlu0 %906, %v905
    %v908 = vpop.permute.xlu0 %907
    %vm909 = vcmp.eq.s32.totalorder %v260, %v908
    %v910 = vsub.f32 %v890, %v904
    %v911 = vsel %vm909, %v910, 0.0
    %v912 = vsel %vm438, %v911, 0.0
    %913 = vadd.xlane.f32.xlu0 %v912
    %v914 = vpop.xlane.xlu0 %913
    %vm915 = vcmp.ne.s32.totalorder %v905, 0
    %v916 = vsel %vm915, 1, 0
    %v917 = vcvt.s32.f32 %v916
    %vm918 = vcmp.eq.f32.partialorder %v890, %v895
    %v919 = vsel %vm918, %v260, 128
    %v920 = vsel %vm438, %v919, 2147483647
    %v921 = vand.u32 %v920, 65535
    %v922 = vshra.s32 %v920, 16
    %v923 = vcvt.s32.f32 %v921
    %v924 = vcvt.s32.f32 %v922
    %925 = vmin.xlane.f32.xlu0 %v924
    %v926 = vpop.xlane.xlu0 %925
    %vm927 = vcmp.eq.f32.partialorder %v924, %v926
    %v928 = vsel %vm927, %v923, inf
    %929 = vmin.xlane.f32.xlu0 %v928
    %v930 = vpop.xlane.xlu0 %929
    %v931 = vcvt.f32.s32 %v930
    %v932 = vcvt.f32.s32 %v926
    %v933 = vshll.u32 %v932, 16
    %v934 = vadd.s32 %v933, %v931
    %v935 = vmul.f32 %v914, %v917
    %v936 = vsub.f32 %v709, %v935
    %vm937 = vcmp.eq.s32.totalorder %v934, %v905
    %v938 = vsel %vm937, 1, 0
    %v939 = vcvt.s32.f32 %v938
    %v940 = vmul.f32 %v939, %v917
    %v941 = vadd.f32 %v714, %v940
    %v942 = vadd.f32 %v715, %v917
    %943 = vmatprep.subr.mxu0 0.0
    %944 = vmatpush1.msra.mxu0 0.0
    %945 = vmatprep.subr.mxu0 0.0
    %946 = vmatpush1.msra.mxu0 0.0
    %947 = vmatprep.subr.mxu0 0.0
    %948 = vmatpush1.msra.mxu0 0.0
    %949 = vmatprep.subr.mxu0 0.0
    %950 = vmatpush1.msra.mxu0 0.0
    %951 = vmatprep.subr.mxu0 0.0
    %952 = vmatpush1.msra.mxu0 0.0
    %953 = vmatprep.subr.mxu0 0.0
    %954 = vmatpush1.msra.mxu0 0.0
    %955 = vmatprep.subr.mxu0 0.0
    %956 = vmatpush1.msra.mxu0 0.0
    %957 = vmatprep.subr.mxu0 0.0
    %958 = vmatpush1.msra.mxu0 0.0
    %959 = vmatprep.subr.mxu0 0.0
    %960 = vmatpush1.msra.mxu0 0.0
    %961 = vmatprep.subr.mxu0 0.0
    %962 = vmatpush1.msra.mxu0 0.0
    %963 = vmatprep.subr.mxu0 0.0
    %964 = vmatpush1.msra.mxu0 0.0
    %965 = vmatprep.subr.mxu0 0.0
    %966 = vmatpush1.msra.mxu0 0.0
    %967 = vmatprep.subr.mxu0 0.0
    %968 = vmatpush1.msra.mxu0 %v35
    %969 = vmatprep.subr.mxu0 0.0
    %970 = vmatpush1.msra.mxu0 %v34
    %971 = vmatprep.subr.mxu0 0.0
    %972 = vmatpush1.msra.mxu0 %v33
    %973 = vmatprep.subr.mxu0 0.0
    %974 = vmatpush1.msra.mxu0 %v32
    %975 = vmatprep.subr.mxu0 0.0
    %976 = vmatpush2.msra.mxu0 0.0
    %977 = vmatprep.subr.mxu0 0.0
    %978 = vmatpush2.msra.mxu0 0.0
    %979 = vmatprep.subr.mxu0 0.0
    %980 = vmatpush2.msra.mxu0 0.0
    %981 = vmatprep.subr.mxu0 0.0
    %982 = vmatpush2.msra.mxu0 0.0
    %983 = vmatprep.subr.mxu0 0.0
    %984 = vmatpush2.msra.mxu0 0.0
    %985 = vmatprep.subr.mxu0 0.0
    %986 = vmatpush2.msra.mxu0 0.0
    %987 = vmatprep.subr.mxu0 0.0
    %988 = vmatpush2.msra.mxu0 0.0
    %989 = vmatprep.subr.mxu0 0.0
    %990 = vmatpush2.msra.mxu0 0.0
    %991 = vmatprep.subr.mxu0 0.0
    %992 = vmatpush2.msra.mxu0 0.0
    %993 = vmatprep.subr.mxu0 0.0
    %994 = vmatpush2.msra.mxu0 0.0
    %995 = vmatprep.subr.mxu0 0.0
    %996 = vmatpush2.msra.mxu0 0.0
    %997 = vmatprep.subr.mxu0 0.0
    %998 = vmatpush2.msra.mxu0 0.0
    %999 = vmatprep.subr.mxu0 0.0
    %1000 = vmatpush2.msra.mxu0 0.0
    %1001 = vmatprep.subr.mxu0 0.0
    %1002 = vmatpush2.msra.mxu0 0.0
    %1003 = vmatprep.subr.mxu0 0.0
    %1004 = vmatpush2.msra.mxu0 0.0
    %1005 = vmatprep.subr.mxu0 0.0
    %1006 = vmatpush2.msra.mxu0 0.0
    %1007 = vmatprep.mubr.f32.mxu0 0.0
    %1008 = vmatmul.mubr.f32.gmra.mxu0 %v821
    %v1009 = vpop.f32.mrf.mxu0
    %v1010 = vadd.f32 0.0, %v1009
    %v1011 = vpop.f32.mrf.mxu0
    %1012 = vdwg.mxu0
    %v1014 = vrot.slane %v1010, 2
    %v1016 = vadd.f32 %v251, %v1014
    %v1017 = vxor.u32 %v1016, 2147483648
    %v1018 = vmul.f32 %v1017, 1.442695
    %v1019 = vpow.pop %v1018
    %v1020 = vadd.f32 %v1019, 1.0
    %v1021 = vrcp.pop %v1020
    %v1022 = vmul.f32 1.0, %v1021
    %v1023 = vtanh.pop %v1016
    %v1025 = vrot.slane %v810, 6
    %v1027 = vmul.f32 %v1022, %v1025
    %1029 = vrot.lane.b32.xlu0 %v1023, 64
    %v1030 = vpop.permute.xlu0 %1029
    %v1032 = vmul.f32 %v1022, %v1030
    %1034 = vrot.lane.b32.xlu0 %v1032, 32
    %v1035 = vpop.permute.xlu0 %1034
    %v1037 = vadd.f32 %v1027, %v1035
    %v1038 = vtanh.pop %v1037
    %1040 = vrot.lane.b32.xlu0 %v1038, 64
    %v1041 = vpop.permute.xlu0 %1040
    %v1043 = vmul.f32 %v1022, %v1041
    %v1045 = vrot.slane %v1043, 6
    %1046 = vrot.lane.b32.xlu0 %v1045, 32
    %v1047 = vpop.permute.xlu0 %1046
    %v1048 = vsel %vm62, %v1047, 0
    %1050 = vmatprep.subr.mxu0 0.0
    %1051 = vmatpush1.msra.mxu0 0.0
    %1052 = vmatprep.subr.mxu0 0.0
    %1053 = vmatpush1.msra.mxu0 0.0
    %1054 = vmatprep.subr.mxu0 0.0
    %1055 = vmatpush1.msra.mxu0 0.0
    %1056 = vmatprep.subr.mxu0 0.0
    %1057 = vmatpush1.msra.mxu0 0.0
    %1058 = vmatprep.subr.mxu0 0.0
    %1059 = vmatpush1.msra.mxu0 0.0
    %1060 = vmatprep.subr.mxu0 0.0
    %1061 = vmatpush1.msra.mxu0 0.0
    %1062 = vmatprep.subr.mxu0 0.0
    %1063 = vmatpush1.msra.mxu0 0.0
    %1064 = vmatprep.subr.mxu0 0.0
    %1065 = vmatpush1.msra.mxu0 0.0
    %1066 = vmatprep.subr.mxu0 0.0
    %1067 = vmatpush1.msra.mxu0 0.0
    %1068 = vmatprep.subr.mxu0 0.0
    %1069 = vmatpush1.msra.mxu0 0.0
    %1070 = vmatprep.subr.mxu0 0.0
    %1071 = vmatpush1.msra.mxu0 0.0
    %1072 = vmatprep.subr.mxu0 0.0
    %1073 = vmatpush1.msra.mxu0 0.0
    %1074 = vmatprep.subr.mxu0 0.0
    %1075 = vmatpush1.msra.mxu0 %v39
    %1076 = vmatprep.subr.mxu0 0.0
    %1077 = vmatpush1.msra.mxu0 %v38
    %1078 = vmatprep.subr.mxu0 0.0
    %1079 = vmatpush1.msra.mxu0 %v37
    %1080 = vmatprep.subr.mxu0 0.0
    %1081 = vmatpush1.msra.mxu0 %v36
    %1082 = vmatprep.subr.mxu0 0.0
    %1083 = vmatpush2.msra.mxu0 0.0
    %1084 = vmatprep.subr.mxu0 0.0
    %1085 = vmatpush2.msra.mxu0 0.0
    %1086 = vmatprep.subr.mxu0 0.0
    %1087 = vmatpush2.msra.mxu0 0.0
    %1088 = vmatprep.subr.mxu0 0.0
    %1089 = vmatpush2.msra.mxu0 0.0
    %1090 = vmatprep.subr.mxu0 0.0
    %1091 = vmatpush2.msra.mxu0 0.0
    %1092 = vmatprep.subr.mxu0 0.0
    %1093 = vmatpush2.msra.mxu0 0.0
    %1094 = vmatprep.subr.mxu0 0.0
    %1095 = vmatpush2.msra.mxu0 0.0
    %1096 = vmatprep.subr.mxu0 0.0
    %1097 = vmatpush2.msra.mxu0 0.0
    %1098 = vmatprep.subr.mxu0 0.0
    %1099 = vmatpush2.msra.mxu0 0.0
    %1100 = vmatprep.subr.mxu0 0.0
    %1101 = vmatpush2.msra.mxu0 0.0
    %1102 = vmatprep.subr.mxu0 0.0
    %1103 = vmatpush2.msra.mxu0 0.0
    %1104 = vmatprep.subr.mxu0 0.0
    %1105 = vmatpush2.msra.mxu0 0.0
    %1106 = vmatprep.subr.mxu0 0.0
    %1107 = vmatpush2.msra.mxu0 0.0
    %1108 = vmatprep.subr.mxu0 0.0
    %1109 = vmatpush2.msra.mxu0 0.0
    %1110 = vmatprep.subr.mxu0 0.0
    %1111 = vmatpush2.msra.mxu0 0.0
    %1112 = vmatprep.subr.mxu0 0.0
    %1113 = vmatpush2.msra.mxu0 0.0
    %1114 = vmatprep.mubr.f32.mxu0 0.0
    %1115 = vmatmul.mubr.f32.gmra.mxu0 %v1048
    %v1116 = vpop.f32.mrf.mxu0
    %v1117 = vadd.f32 %v362, %v1116
    %v1118 = vpop.f32.mrf.mxu0
    %1119 = vdwg.mxu0
    %v1120 = vsel %vm438, %v1117, -inf
    %1121 = vmax.xlane.f32.xlu0 %v1120
    %v1122 = vpop.xlane.xlu0 %1121
    %v1123 = vsub.f32 %v1117, %v1122
    %v1124 = vmul.f32 %v1123, 1.442695
    %v1125 = vpow.pop %v1124
    %v1126 = vsel %vm438, %v1125, 0.0
    %1127 = vadd.xlane.f32.xlu0 %v1126
    %v1128 = vpop.xlane.xlu0 %1127
    %v1129 = vlog2.pop %v1128
    %v1130 = vmul.f32 %v1129, 0.6931472
    %v1131 = vadd.f32 %v1122, %v1130
    %v1132 = vld [vmem:[%s3 + $0x6] sm:$0x3]
    %1133 = vset.pattern.permute.xlu0 0
    %1134 = vperm.xlu0 %1133, %v1132
    %v1135 = vpop.permute.xlu0 %1134
    %vm1136 = vcmp.eq.s32.totalorder %v260, %v1135
    %v1137 = vsub.f32 %v1117, %v1131
    %v1138 = vsel %vm1136, %v1137, 0.0
    %v1139 = vsel %vm438, %v1138, 0.0
    %1140 = vadd.xlane.f32.xlu0 %v1139
    %v1141 = vpop.xlane.xlu0 %1140
    %vm1142 = vcmp.ne.s32.totalorder %v1132, 0
    %v1143 = vsel %vm1142, 1, 0
    %v1144 = vcvt.s32.f32 %v1143
    %vm1145 = vcmp.eq.f32.partialorder %v1117, %v1122
    %v1146 = vsel %vm1145, %v260, 128
    %v1147 = vsel %vm438, %v1146, 2147483647
    %v1148 = vand.u32 %v1147, 65535
    %v1149 = vshra.s32 %v1147, 16
    %v1150 = vcvt.s32.f32 %v1148
    %v1151 = vcvt.s32.f32 %v1149
    %1152 = vmin.xlane.f32.xlu0 %v1151
    %v1153 = vpop.xlane.xlu0 %1152
    %vm1154 = vcmp.eq.f32.partialorder %v1151, %v1153
    %v1155 = vsel %vm1154, %v1150, inf
    %1156 = vmin.xlane.f32.xlu0 %v1155
    %v1157 = vpop.xlane.xlu0 %1156
    %v1158 = vcvt.f32.s32 %v1157
    %v1159 = vcvt.f32.s32 %v1153
    %v1160 = vshll.u32 %v1159, 16
    %v1161 = vadd.s32 %v1160, %v1158
    %v1162 = vmul.f32 %v1141, %v1144
    %v1163 = vsub.f32 %v936, %v1162
    %vm1164 = vcmp.eq.s32.totalorder %v1161, %v1132
    %v1165 = vsel %vm1164, 1, 0
    %v1166 = vcvt.s32.f32 %v1165
    %v1167 = vmul.f32 %v1166, %v1144
    %v1168 = vadd.f32 %v941, %v1167
    %v1169 = vadd.f32 %v942, %v1144
    %1170 = vmatprep.subr.mxu0 0.0
    %1171 = vmatpush1.msra.mxu0 0.0
    %1172 = vmatprep.subr.mxu0 0.0
    %1173 = vmatpush1.msra.mxu0 0.0
    %1174 = vmatprep.subr.mxu0 0.0
    %1175 = vmatpush1.msra.mxu0 0.0
    %1176 = vmatprep.subr.mxu0 0.0
    %1177 = vmatpush1.msra.mxu0 0.0
    %1178 = vmatprep.subr.mxu0 0.0
    %1179 = vmatpush1.msra.mxu0 0.0
    %1180 = vmatprep.subr.mxu0 0.0
    %1181 = vmatpush1.msra.mxu0 0.0
    %1182 = vmatprep.subr.mxu0 0.0
    %1183 = vmatpush1.msra.mxu0 0.0
    %1184 = vmatprep.subr.mxu0 0.0
    %1185 = vmatpush1.msra.mxu0 0.0
    %1186 = vmatprep.subr.mxu0 0.0
    %1187 = vmatpush1.msra.mxu0 0.0
    %1188 = vmatprep.subr.mxu0 0.0
    %1189 = vmatpush1.msra.mxu0 0.0
    %1190 = vmatprep.subr.mxu0 0.0
    %1191 = vmatpush1.msra.mxu0 0.0
    %1192 = vmatprep.subr.mxu0 0.0
    %1193 = vmatpush1.msra.mxu0 0.0
    %1194 = vmatprep.subr.mxu0 0.0
    %1195 = vmatpush1.msra.mxu0 %v35
    %1196 = vmatprep.subr.mxu0 0.0
    %1197 = vmatpush1.msra.mxu0 %v34
    %1198 = vmatprep.subr.mxu0 0.0
    %1199 = vmatpush1.msra.mxu0 %v33
    %1200 = vmatprep.subr.mxu0 0.0
    %1201 = vmatpush1.msra.mxu0 %v32
    %1202 = vmatprep.subr.mxu0 0.0
    %1203 = vmatpush2.msra.mxu0 0.0
    %1204 = vmatprep.subr.mxu0 0.0
    %1205 = vmatpush2.msra.mxu0 0.0
    %1206 = vmatprep.subr.mxu0 0.0
    %1207 = vmatpush2.msra.mxu0 0.0
    %1208 = vmatprep.subr.mxu0 0.0
    %1209 = vmatpush2.msra.mxu0 0.0
    %1210 = vmatprep.subr.mxu0 0.0
    %1211 = vmatpush2.msra.mxu0 0.0
    %1212 = vmatprep.subr.mxu0 0.0
    %1213 = vmatpush2.msra.mxu0 0.0
    %1214 = vmatprep.subr.mxu0 0.0
    %1215 = vmatpush2.msra.mxu0 0.0
    %1216 = vmatprep.subr.mxu0 0.0
    %1217 = vmatpush2.msra.mxu0 0.0
    %1218 = vmatprep.subr.mxu0 0.0
    %1219 = vmatpush2.msra.mxu0 0.0
    %1220 = vmatprep.subr.mxu0 0.0
    %1221 = vmatpush2.msra.mxu0 0.0
    %1222 = vmatprep.subr.mxu0 0.0
    %1223 = vmatpush2.msra.mxu0 0.0
    %1224 = vmatprep.subr.mxu0 0.0
    %1225 = vmatpush2.msra.mxu0 0.0
    %1226 = vmatprep.subr.mxu0 0.0
    %1227 = vmatpush2.msra.mxu0 0.0
    %1228 = vmatprep.subr.mxu0 0.0
    %1229 = vmatpush2.msra.mxu0 0.0
    %1230 = vmatprep.subr.mxu0 0.0
    %1231 = vmatpush2.msra.mxu0 0.0
    %1232 = vmatprep.subr.mxu0 0.0
    %1233 = vmatpush2.msra.mxu0 0.0
    %1234 = vmatprep.mubr.f32.mxu0 0.0
    %1235 = vmatmul.mubr.f32.gmra.mxu0 %v1048
    %v1236 = vpop.f32.mrf.mxu0
    %v1237 = vadd.f32 0.0, %v1236
    %v1238 = vpop.f32.mrf.mxu0
    %1239 = vdwg.mxu0
    %v1240 = vadd.f32 %v256, %v1237
    %v1241 = vxor.u32 %v1240, 2147483648
    %v1242 = vmul.f32 %v1241, 1.442695
    %v1243 = vpow.pop %v1242
    %v1244 = vadd.f32 %v1243, 1.0
    %v1245 = vrcp.pop %v1244
    %v1246 = vmul.f32 1.0, %v1245
    %v1247 = vtanh.pop %v1240
    %v1249 = vrot.slane %v1037, 6
    %v1251 = vmul.f32 %v1246, %v1249
    %1253 = vrot.lane.b32.xlu0 %v1247, 64
    %v1254 = vpop.permute.xlu0 %1253
    %v1256 = vmul.f32 %v1246, %v1254
    %1258 = vrot.lane.b32.xlu0 %v1256, 32
    %v1259 = vpop.permute.xlu0 %1258
    %v1261 = vadd.f32 %v1251, %v1259
    %v1262 = vtanh.pop %v1261
    %1264 = vrot.lane.b32.xlu0 %v1262, 64
    %v1265 = vpop.permute.xlu0 %1264
    %v1267 = vmul.f32 %v1246, %v1265
    %1269 = vrot.lane.b32.xlu0 %v1267, 32
    %v1270 = vpop.permute.xlu0 %1269
    %v1271 = vsel %vm62, %v1270, 0
    %1273 = vmatprep.subr.mxu0 0.0
    %1274 = vmatpush1.msra.mxu0 0.0
    %1275 = vmatprep.subr.mxu0 0.0
    %1276 = vmatpush1.msra.mxu0 0.0
    %1277 = vmatprep.subr.mxu0 0.0
    %1278 = vmatpush1.msra.mxu0 0.0
    %1279 = vmatprep.subr.mxu0 0.0
    %1280 = vmatpush1.msra.mxu0 0.0
    %1281 = vmatprep.subr.mxu0 0.0
    %1282 = vmatpush1.msra.mxu0 0.0
    %1283 = vmatprep.subr.mxu0 0.0
    %1284 = vmatpush1.msra.mxu0 0.0
    %1285 = vmatprep.subr.mxu0 0.0
    %1286 = vmatpush1.msra.mxu0 0.0
    %1287 = vmatprep.subr.mxu0 0.0
    %1288 = vmatpush1.msra.mxu0 0.0
    %1289 = vmatprep.subr.mxu0 0.0
    %1290 = vmatpush1.msra.mxu0 0.0
    %1291 = vmatprep.subr.mxu0 0.0
    %1292 = vmatpush1.msra.mxu0 0.0
    %1293 = vmatprep.subr.mxu0 0.0
    %1294 = vmatpush1.msra.mxu0 0.0
    %1295 = vmatprep.subr.mxu0 0.0
    %1296 = vmatpush1.msra.mxu0 0.0
    %1297 = vmatprep.subr.mxu0 0.0
    %1298 = vmatpush1.msra.mxu0 %v39
    %1299 = vmatprep.subr.mxu0 0.0
    %1300 = vmatpush1.msra.mxu0 %v38
    %1301 = vmatprep.subr.mxu0 0.0
    %1302 = vmatpush1.msra.mxu0 %v37
    %1303 = vmatprep.subr.mxu0 0.0
    %1304 = vmatpush1.msra.mxu0 %v36
    %1305 = vmatprep.subr.mxu0 0.0
    %1306 = vmatpush2.msra.mxu0 0.0
    %1307 = vmatprep.subr.mxu0 0.0
    %1308 = vmatpush2.msra.mxu0 0.0
    %1309 = vmatprep.subr.mxu0 0.0
    %1310 = vmatpush2.msra.mxu0 0.0
    %1311 = vmatprep.subr.mxu0 0.0
    %1312 = vmatpush2.msra.mxu0 0.0
    %1313 = vmatprep.subr.mxu0 0.0
    %1314 = vmatpush2.msra.mxu0 0.0
    %1315 = vmatprep.subr.mxu0 0.0
    %1316 = vmatpush2.msra.mxu0 0.0
    %1317 = vmatprep.subr.mxu0 0.0
    %1318 = vmatpush2.msra.mxu0 0.0
    %1319 = vmatprep.subr.mxu0 0.0
    %1320 = vmatpush2.msra.mxu0 0.0
    %1321 = vmatprep.subr.mxu0 0.0
    %1322 = vmatpush2.msra.mxu0 0.0
    %1323 = vmatprep.subr.mxu0 0.0
    %1324 = vmatpush2.msra.mxu0 0.0
    %1325 = vmatprep.subr.mxu0 0.0
    %1326 = vmatpush2.msra.mxu0 0.0
    %1327 = vmatprep.subr.mxu0 0.0
    %1328 = vmatpush2.msra.mxu0 0.0
    %1329 = vmatprep.subr.mxu0 0.0
    %1330 = vmatpush2.msra.mxu0 0.0
    %1331 = vmatprep.subr.mxu0 0.0
    %1332 = vmatpush2.msra.mxu0 0.0
    %1333 = vmatprep.subr.mxu0 0.0
    %1334 = vmatpush2.msra.mxu0 0.0
    %1335 = vmatprep.subr.mxu0 0.0
    %1336 = vmatpush2.msra.mxu0 0.0
    %1337 = vmatprep.mubr.f32.mxu0 0.0
    %1338 = vmatmul.mubr.f32.gmra.mxu0 %v1271
    %v1339 = vpop.f32.mrf.mxu0
    %v1340 = vadd.f32 %v362, %v1339
    %v1341 = vpop.f32.mrf.mxu0
    %1342 = vdwg.mxu0
    %v1343 = vsel %vm438, %v1340, -inf
    %1344 = vmax.xlane.f32.xlu0 %v1343
    %v1345 = vpop.xlane.xlu0 %1344
    %v1346 = vsub.f32 %v1340, %v1345
    %v1347 = vmul.f32 %v1346, 1.442695
    %v1348 = vpow.pop %v1347
    %v1349 = vsel %vm438, %v1348, 0.0
    %1350 = vadd.xlane.f32.xlu0 %v1349
    %v1351 = vpop.xlane.xlu0 %1350
    %v1352 = vlog2.pop %v1351
    %v1353 = vmul.f32 %v1352, 0.6931472
    %v1354 = vadd.f32 %v1345, %v1353
    %v1355 = vld [vmem:[%s3 + $0x8] sm:$0x3]
    %1356 = vset.pattern.permute.xlu0 0
    %1357 = vperm.xlu0 %1356, %v1355
    %v1358 = vpop.permute.xlu0 %1357
    %vm1359 = vcmp.eq.s32.totalorder %v260, %v1358
    %v1360 = vsub.f32 %v1340, %v1354
    %v1361 = vsel %vm1359, %v1360, 0.0
    %v1362 = vsel %vm438, %v1361, 0.0
    %1363 = vadd.xlane.f32.xlu0 %v1362
    %v1364 = vpop.xlane.xlu0 %1363
    %vm1365 = vcmp.ne.s32.totalorder %v1355, 0
    %v1366 = vsel %vm1365, 1, 0
    %v1367 = vcvt.s32.f32 %v1366
    %vm1368 = vcmp.eq.f32.partialorder %v1340, %v1345
    %v1369 = vsel %vm1368, %v260, 128
    %v1370 = vsel %vm438, %v1369, 2147483647
    %v1371 = vand.u32 %v1370, 65535
    %v1372 = vshra.s32 %v1370, 16
    %v1373 = vcvt.s32.f32 %v1371
    %v1374 = vcvt.s32.f32 %v1372
    %1375 = vmin.xlane.f32.xlu0 %v1374
    %v1376 = vpop.xlane.xlu0 %1375
    %vm1377 = vcmp.eq.f32.partialorder %v1374, %v1376
    %v1378 = vsel %vm1377, %v1373, inf
    %1379 = vmin.xlane.f32.xlu0 %v1378
    %v1380 = vpop.xlane.xlu0 %1379
    %v1381 = vcvt.f32.s32 %v1380
    %v1382 = vcvt.f32.s32 %v1376
    %v1383 = vshll.u32 %v1382, 16
    %v1384 = vadd.s32 %v1383, %v1381
    %v1385 = vmul.f32 %v1364, %v1367
    %v1386 = vsub.f32 %v1163, %v1385
    %vm1387 = vcmp.eq.s32.totalorder %v1384, %v1355
    %v1388 = vsel %vm1387, 1, 0
    %v1389 = vcvt.s32.f32 %v1388
    %v1390 = vmul.f32 %v1389, %v1367
    %v1391 = vadd.f32 %v1168, %v1390
    %v1392 = vadd.f32 %v1169, %v1367
    %1393 = vmatprep.subr.mxu0 0.0
    %1394 = vmatpush1.msra.mxu0 0.0
    %1395 = vmatprep.subr.mxu0 0.0
    %1396 = vmatpush1.msra.mxu0 0.0
    %1397 = vmatprep.subr.mxu0 0.0
    %1398 = vmatpush1.msra.mxu0 0.0
    %1399 = vmatprep.subr.mxu0 0.0
    %1400 = vmatpush1.msra.mxu0 0.0
    %1401 = vmatprep.subr.mxu0 0.0
    %1402 = vmatpush1.msra.mxu0 0.0
    %1403 = vmatprep.subr.mxu0 0.0
    %1404 = vmatpush1.msra.mxu0 0.0
    %1405 = vmatprep.subr.mxu0 0.0
    %1406 = vmatpush1.msra.mxu0 0.0
    %1407 = vmatprep.subr.mxu0 0.0
    %1408 = vmatpush1.msra.mxu0 0.0
    %1409 = vmatprep.subr.mxu0 0.0
    %1410 = vmatpush1.msra.mxu0 0.0
    %1411 = vmatprep.subr.mxu0 0.0
    %1412 = vmatpush1.msra.mxu0 0.0
    %1413 = vmatprep.subr.mxu0 0.0
    %1414 = vmatpush1.msra.mxu0 0.0
    %1415 = vmatprep.subr.mxu0 0.0
    %1416 = vmatpush1.msra.mxu0 0.0
    %1417 = vmatprep.subr.mxu0 0.0
    %1418 = vmatpush1.msra.mxu0 %v35
    %1419 = vmatprep.subr.mxu0 0.0
    %1420 = vmatpush1.msra.mxu0 %v34
    %1421 = vmatprep.subr.mxu0 0.0
    %1422 = vmatpush1.msra.mxu0 %v33
    %1423 = vmatprep.subr.mxu0 0.0
    %1424 = vmatpush1.msra.mxu0 %v32
    %1425 = vmatprep.subr.mxu0 0.0
    %1426 = vmatpush2.msra.mxu0 0.0
    %1427 = vmatprep.subr.mxu0 0.0
    %1428 = vmatpush2.msra.mxu0 0.0
    %1429 = vmatprep.subr.mxu0 0.0
    %1430 = vmatpush2.msra.mxu0 0.0
    %1431 = vmatprep.subr.mxu0 0.0
    %1432 = vmatpush2.msra.mxu0 0.0
    %1433 = vmatprep.subr.mxu0 0.0
    %1434 = vmatpush2.msra.mxu0 0.0
    %1435 = vmatprep.subr.mxu0 0.0
    %1436 = vmatpush2.msra.mxu0 0.0
    %1437 = vmatprep.subr.mxu0 0.0
    %1438 = vmatpush2.msra.mxu0 0.0
    %1439 = vmatprep.subr.mxu0 0.0
    %1440 = vmatpush2.msra.mxu0 0.0
    %1441 = vmatprep.subr.mxu0 0.0
    %1442 = vmatpush2.msra.mxu0 0.0
    %1443 = vmatprep.subr.mxu0 0.0
    %1444 = vmatpush2.msra.mxu0 0.0
    %1445 = vmatprep.subr.mxu0 0.0
    %1446 = vmatpush2.msra.mxu0 0.0
    %1447 = vmatprep.subr.mxu0 0.0
    %1448 = vmatpush2.msra.mxu0 0.0
    %1449 = vmatprep.subr.mxu0 0.0
    %1450 = vmatpush2.msra.mxu0 0.0
    %1451 = vmatprep.subr.mxu0 0.0
    %1452 = vmatpush2.msra.mxu0 0.0
    %1453 = vmatprep.subr.mxu0 0.0
    %1454 = vmatpush2.msra.mxu0 0.0
    %1455 = vmatprep.subr.mxu0 0.0
    %1456 = vmatpush2.msra.mxu0 0.0
    %1457 = vmatprep.mubr.f32.mxu0 0.0
    %1458 = vmatmul.mubr.f32.gmra.mxu0 %v1271
    %v1459 = vpop.f32.mrf.mxu0
    %v1460 = vadd.f32 0.0, %v1459
    %v1461 = vpop.f32.mrf.mxu0
    %1462 = vdwg.mxu0
    %v1464 = vrot.slane %v1460, 6
    %v1466 = vadd.f32 %v256, %v1464
    %v1467 = vxor.u32 %v1466, 2147483648
    %v1468 = vmul.f32 %v1467, 1.442695
    %v1469 = vpow.pop %v1468
    %v1470 = vadd.f32 %v1469, 1.0
    %v1471 = vrcp.pop %v1470
    %v1472 = vmul.f32 1.0, %v1471
    %v1473 = vtanh.pop %v1466
    %v1475 = vrot.slane %v1261, 6
    %v1477 = vmul.f32 %v1472, %v1475
    %1479 = vrot.lane.b32.xlu0 %v1473, 64
    %v1480 = vpop.permute.xlu0 %1479
    %v1482 = vmul.f32 %v1472, %v1480
    %1484 = vrot.lane.b32.xlu0 %v1482, 32
    %v1485 = vpop.permute.xlu0 %1484
    %v1487 = vadd.f32 %v1477, %v1485
    %v1488 = vtanh.pop %v1487
    %1490 = vrot.lane.b32.xlu0 %v1488, 64
    %v1491 = vpop.permute.xlu0 %1490
    %v1493 = vmul.f32 %v1472, %v1491
    %v1495 = vrot.slane %v1493, 2
    %1496 = vrot.lane.b32.xlu0 %v1495, 32
    %v1497 = vpop.permute.xlu0 %1496
    %v1498 = vsel %vm62, %v1497, 0
    %1500 = vmatprep.subr.mxu0 0.0
    %1501 = vmatpush1.msra.mxu0 0.0
    %1502 = vmatprep.subr.mxu0 0.0
    %1503 = vmatpush1.msra.mxu0 0.0
    %1504 = vmatprep.subr.mxu0 0.0
    %1505 = vmatpush1.msra.mxu0 0.0
    %1506 = vmatprep.subr.mxu0 0.0
    %1507 = vmatpush1.msra.mxu0 0.0
    %1508 = vmatprep.subr.mxu0 0.0
    %1509 = vmatpush1.msra.mxu0 0.0
    %1510 = vmatprep.subr.mxu0 0.0
    %1511 = vmatpush1.msra.mxu0 0.0
    %1512 = vmatprep.subr.mxu0 0.0
    %1513 = vmatpush1.msra.mxu0 0.0
    %1514 = vmatprep.subr.mxu0 0.0
    %1515 = vmatpush1.msra.mxu0 0.0
    %1516 = vmatprep.subr.mxu0 0.0
    %1517 = vmatpush1.msra.mxu0 0.0
    %1518 = vmatprep.subr.mxu0 0.0
    %1519 = vmatpush1.msra.mxu0 0.0
    %1520 = vmatprep.subr.mxu0 0.0
    %1521 = vmatpush1.msra.mxu0 0.0
    %1522 = vmatprep.subr.mxu0 0.0
    %1523 = vmatpush1.msra.mxu0 0.0
    %1524 = vmatprep.subr.mxu0 0.0
    %1525 = vmatpush1.msra.mxu0 %v39
    %1526 = vmatprep.subr.mxu0 0.0
    %1527 = vmatpush1.msra.mxu0 %v38
    %1528 = vmatprep.subr.mxu0 0.0
    %1529 = vmatpush1.msra.mxu0 %v37
    %1530 = vmatprep.subr.mxu0 0.0
    %1531 = vmatpush1.msra.mxu0 %v36
    %1532 = vmatprep.subr.mxu0 0.0
    %1533 = vmatpush2.msra.mxu0 0.0
    %1534 = vmatprep.subr.mxu0 0.0
    %1535 = vmatpush2.msra.mxu0 0.0
    %1536 = vmatprep.subr.mxu0 0.0
    %1537 = vmatpush2.msra.mxu0 0.0
    %1538 = vmatprep.subr.mxu0 0.0
    %1539 = vmatpush2.msra.mxu0 0.0
    %1540 = vmatprep.subr.mxu0 0.0
    %1541 = vmatpush2.msra.mxu0 0.0
    %1542 = vmatprep.subr.mxu0 0.0
    %1543 = vmatpush2.msra.mxu0 0.0
    %1544 = vmatprep.subr.mxu0 0.0
    %1545 = vmatpush2.msra.mxu0 0.0
    %1546 = vmatprep.subr.mxu0 0.0
    %1547 = vmatpush2.msra.mxu0 0.0
    %1548 = vmatprep.subr.mxu0 0.0
    %1549 = vmatpush2.msra.mxu0 0.0
    %1550 = vmatprep.subr.mxu0 0.0
    %1551 = vmatpush2.msra.mxu0 0.0
    %1552 = vmatprep.subr.mxu0 0.0
    %1553 = vmatpush2.msra.mxu0 0.0
    %1554 = vmatprep.subr.mxu0 0.0
    %1555 = vmatpush2.msra.mxu0 0.0
    %1556 = vmatprep.subr.mxu0 0.0
    %1557 = vmatpush2.msra.mxu0 0.0
    %1558 = vmatprep.subr.mxu0 0.0
    %1559 = vmatpush2.msra.mxu0 0.0
    %1560 = vmatprep.subr.mxu0 0.0
    %1561 = vmatpush2.msra.mxu0 0.0
    %1562 = vmatprep.subr.mxu0 0.0
    %1563 = vmatpush2.msra.mxu0 0.0
    %1564 = vmatprep.mubr.f32.mxu0 0.0
    %1565 = vmatmul.mubr.f32.gmra.mxu0 %v1498
    %v1566 = vpop.f32.mrf.mxu0
    %v1567 = vadd.f32 %v362, %v1566
    %v1568 = vpop.f32.mrf.mxu0
    %1569 = vdwg.mxu0
    %v1570 = vsel %vm438, %v1567, -inf
    %1571 = vmax.xlane.f32.xlu0 %v1570
    %v1572 = vpop.xlane.xlu0 %1571
    %v1573 = vsub.f32 %v1567, %v1572
    %v1574 = vmul.f32 %v1573, 1.442695
    %v1575 = vpow.pop %v1574
    %v1576 = vsel %vm438, %v1575, 0.0
    %1577 = vadd.xlane.f32.xlu0 %v1576
    %v1578 = vpop.xlane.xlu0 %1577
    %v1579 = vlog2.pop %v1578
    %v1580 = vmul.f32 %v1579, 0.6931472
    %v1581 = vadd.f32 %v1572, %v1580
    %v1582 = vld [vmem:[%s3 + $0xa] sm:$0x3]
    %1583 = vset.pattern.permute.xlu0 0
    %1584 = vperm.xlu0 %1583, %v1582
    %v1585 = vpop.permute.xlu0 %1584
    %vm1586 = vcmp.eq.s32.totalorder %v260, %v1585
    %v1587 = vsub.f32 %v1567, %v1581
    %v1588 = vsel %vm1586, %v1587, 0.0
    %v1589 = vsel %vm438, %v1588, 0.0
    %1590 = vadd.xlane.f32.xlu0 %v1589
    %v1591 = vpop.xlane.xlu0 %1590
    %vm1592 = vcmp.ne.s32.totalorder %v1582, 0
    %v1593 = vsel %vm1592, 1, 0
    %v1594 = vcvt.s32.f32 %v1593
    %vm1595 = vcmp.eq.f32.partialorder %v1567, %v1572
    %v1596 = vsel %vm1595, %v260, 128
    %v1597 = vsel %vm438, %v1596, 2147483647
    %v1598 = vand.u32 %v1597, 65535
    %v1599 = vshra.s32 %v1597, 16
    %v1600 = vcvt.s32.f32 %v1598
    %v1601 = vcvt.s32.f32 %v1599
    %1602 = vmin.xlane.f32.xlu0 %v1601
    %v1603 = vpop.xlane.xlu0 %1602
    %vm1604 = vcmp.eq.f32.partialorder %v1601, %v1603
    %v1605 = vsel %vm1604, %v1600, inf
    %1606 = vmin.xlane.f32.xlu0 %v1605
    %v1607 = vpop.xlane.xlu0 %1606
    %v1608 = vcvt.f32.s32 %v1607
    %v1609 = vcvt.f32.s32 %v1603
    %v1610 = vshll.u32 %v1609, 16
    %v1611 = vadd.s32 %v1610, %v1608
    %v1612 = vmul.f32 %v1591, %v1594
    %v1613 = vsub.f32 %v1386, %v1612
    %vm1614 = vcmp.eq.s32.totalorder %v1611, %v1582
    %v1615 = vsel %vm1614, 1, 0
    %v1616 = vcvt.s32.f32 %v1615
    %v1617 = vmul.f32 %v1616, %v1594
    %v1618 = vadd.f32 %v1391, %v1617
    %v1619 = vadd.f32 %v1392, %v1594
    %1620 = vmatprep.subr.mxu0 0.0
    %1621 = vmatpush1.msra.mxu0 0.0
    %1622 = vmatprep.subr.mxu0 0.0
    %1623 = vmatpush1.msra.mxu0 0.0
    %1624 = vmatprep.subr.mxu0 0.0
    %1625 = vmatpush1.msra.mxu0 0.0
    %1626 = vmatprep.subr.mxu0 0.0
    %1627 = vmatpush1.msra.mxu0 0.0
    %1628 = vmatprep.subr.mxu0 0.0
    %1629 = vmatpush1.msra.mxu0 0.0
    %1630 = vmatprep.subr.mxu0 0.0
    %1631 = vmatpush1.msra.mxu0 0.0
    %1632 = vmatprep.subr.mxu0 0.0
    %1633 = vmatpush1.msra.mxu0 0.0
    %1634 = vmatprep.subr.mxu0 0.0
    %1635 = vmatpush1.msra.mxu0 0.0
    %1636 = vmatprep.subr.mxu0 0.0
    %1637 = vmatpush1.msra.mxu0 0.0
    %1638 = vmatprep.subr.mxu0 0.0
    %1639 = vmatpush1.msra.mxu0 0.0
    %1640 = vmatprep.subr.mxu0 0.0
    %1641 = vmatpush1.msra.mxu0 0.0
    %1642 = vmatprep.subr.mxu0 0.0
    %1643 = vmatpush1.msra.mxu0 0.0
    %1644 = vmatprep.subr.mxu0 0.0
    %1645 = vmatpush1.msra.mxu0 %v35
    %1646 = vmatprep.subr.mxu0 0.0
    %1647 = vmatpush1.msra.mxu0 %v34
    %1648 = vmatprep.subr.mxu0 0.0
    %1649 = vmatpush1.msra.mxu0 %v33
    %1650 = vmatprep.subr.mxu0 0.0
    %1651 = vmatpush1.msra.mxu0 %v32
    %1652 = vmatprep.subr.mxu0 0.0
    %1653 = vmatpush2.msra.mxu0 0.0
    %1654 = vmatprep.subr.mxu0 0.0
    %1655 = vmatpush2.msra.mxu0 0.0
    %1656 = vmatprep.subr.mxu0 0.0
    %1657 = vmatpush2.msra.mxu0 0.0
    %1658 = vmatprep.subr.mxu0 0.0
    %1659 = vmatpush2.msra.mxu0 0.0
    %1660 = vmatprep.subr.mxu0 0.0
    %1661 = vmatpush2.msra.mxu0 0.0
    %1662 = vmatprep.subr.mxu0 0.0
    %1663 = vmatpush2.msra.mxu0 0.0
    %1664 = vmatprep.subr.mxu0 0.0
    %1665 = vmatpush2.msra.mxu0 0.0
    %1666 = vmatprep.subr.mxu0 0.0
    %1667 = vmatpush2.msra.mxu0 0.0
    %1668 = vmatprep.subr.mxu0 0.0
    %1669 = vmatpush2.msra.mxu0 0.0
    %1670 = vmatprep.subr.mxu0 0.0
    %1671 = vmatpush2.msra.mxu0 0.0
    %1672 = vmatprep.subr.mxu0 0.0
    %1673 = vmatpush2.msra.mxu0 0.0
    %1674 = vmatprep.subr.mxu0 0.0
    %1675 = vmatpush2.msra.mxu0 0.0
    %1676 = vmatprep.subr.mxu0 0.0
    %1677 = vmatpush2.msra.mxu0 0.0
    %1678 = vmatprep.subr.mxu0 0.0
    %1679 = vmatpush2.msra.mxu0 0.0
    %1680 = vmatprep.subr.mxu0 0.0
    %1681 = vmatpush2.msra.mxu0 0.0
    %1682 = vmatprep.subr.mxu0 0.0
    %1683 = vmatpush2.msra.mxu0 0.0
    %1684 = vmatprep.mubr.f32.mxu0 0.0
    %1685 = vmatmul.mubr.f32.gmra.mxu0 %v1498
    %v1686 = vpop.f32.mrf.mxu0
    %v1687 = vadd.f32 0.0, %v1686
    %v1688 = vpop.f32.mrf.mxu0
    %1689 = vdwg.mxu0
    %v1691 = vrot.slane %v1687, 4
    %v1693 = vadd.f32 %v256, %v1691
    %v1694 = vxor.u32 %v1693, 2147483648
    %v1695 = vmul.f32 %v1694, 1.442695
    %v1696 = vpow.pop %v1695
    %v1697 = vadd.f32 %v1696, 1.0
    %v1698 = vrcp.pop %v1697
    %v1699 = vmul.f32 1.0, %v1698
    %v1700 = vtanh.pop %v1693
    %v1702 = vrot.slane %v1487, 6
    %v1704 = vmul.f32 %v1699, %v1702
    %1706 = vrot.lane.b32.xlu0 %v1700, 64
    %v1707 = vpop.permute.xlu0 %1706
    %v1709 = vmul.f32 %v1699, %v1707
    %1711 = vrot.lane.b32.xlu0 %v1709, 32
    %v1712 = vpop.permute.xlu0 %1711
    %v1714 = vadd.f32 %v1704, %v1712
    %v1715 = vtanh.pop %v1714
    %1717 = vrot.lane.b32.xlu0 %v1715, 64
    %v1718 = vpop.permute.xlu0 %1717
    %v1720 = vmul.f32 %v1699, %v1718
    %v1722 = vrot.slane %v1720, 4
    %1723 = vrot.lane.b32.xlu0 %v1722, 32
    %v1724 = vpop.permute.xlu0 %1723
    %v1725 = vsel %vm62, %v1724, 0
    %1727 = vmatprep.subr.mxu0 0.0
    %1728 = vmatpush1.msra.mxu0 0.0
    %1729 = vmatprep.subr.mxu0 0.0
    %1730 = vmatpush1.msra.mxu0 0.0
    %1731 = vmatprep.subr.mxu0 0.0
    %1732 = vmatpush1.msra.mxu0 0.0
    %1733 = vmatprep.subr.mxu0 0.0
    %1734 = vmatpush1.msra.mxu0 0.0
    %1735 = vmatprep.subr.mxu0 0.0
    %1736 = vmatpush1.msra.mxu0 0.0
    %1737 = vmatprep.subr.mxu0 0.0
    %1738 = vmatpush1.msra.mxu0 0.0
    %1739 = vmatprep.subr.mxu0 0.0
    %1740 = vmatpush1.msra.mxu0 0.0
    %1741 = vmatprep.subr.mxu0 0.0
    %1742 = vmatpush1.msra.mxu0 0.0
    %1743 = vmatprep.subr.mxu0 0.0
    %1744 = vmatpush1.msra.mxu0 0.0
    %1745 = vmatprep.subr.mxu0 0.0
    %1746 = vmatpush1.msra.mxu0 0.0
    %1747 = vmatprep.subr.mxu0 0.0
    %1748 = vmatpush1.msra.mxu0 0.0
    %1749 = vmatprep.subr.mxu0 0.0
    %1750 = vmatpush1.msra.mxu0 0.0
    %1751 = vmatprep.subr.mxu0 0.0
    %1752 = vmatpush1.msra.mxu0 %v39
    %1753 = vmatprep.subr.mxu0 0.0
    %1754 = vmatpush1.msra.mxu0 %v38
    %1755 = vmatprep.subr.mxu0 0.0
    %1756 = vmatpush1.msra.mxu0 %v37
    %1757 = vmatprep.subr.mxu0 0.0
    %1758 = vmatpush1.msra.mxu0 %v36
    %1759 = vmatprep.subr.mxu0 0.0
    %1760 = vmatpush2.msra.mxu0 0.0
    %1761 = vmatprep.subr.mxu0 0.0
    %1762 = vmatpush2.msra.mxu0 0.0
    %1763 = vmatprep.subr.mxu0 0.0
    %1764 = vmatpush2.msra.mxu0 0.0
    %1765 = vmatprep.subr.mxu0 0.0
    %1766 = vmatpush2.msra.mxu0 0.0
    %1767 = vmatprep.subr.mxu0 0.0
    %1768 = vmatpush2.msra.mxu0 0.0
    %1769 = vmatprep.subr.mxu0 0.0
    %1770 = vmatpush2.msra.mxu0 0.0
    %1771 = vmatprep.subr.mxu0 0.0
    %1772 = vmatpush2.msra.mxu0 0.0
    %1773 = vmatprep.subr.mxu0 0.0
    %1774 = vmatpush2.msra.mxu0 0.0
    %1775 = vmatprep.subr.mxu0 0.0
    %1776 = vmatpush2.msra.mxu0 0.0
    %1777 = vmatprep.subr.mxu0 0.0
    %1778 = vmatpush2.msra.mxu0 0.0
    %1779 = vmatprep.subr.mxu0 0.0
    %1780 = vmatpush2.msra.mxu0 0.0
    %1781 = vmatprep.subr.mxu0 0.0
    %1782 = vmatpush2.msra.mxu0 0.0
    %1783 = vmatprep.subr.mxu0 0.0
    %1784 = vmatpush2.msra.mxu0 0.0
    %1785 = vmatprep.subr.mxu0 0.0
    %1786 = vmatpush2.msra.mxu0 0.0
    %1787 = vmatprep.subr.mxu0 0.0
    %1788 = vmatpush2.msra.mxu0 0.0
    %1789 = vmatprep.subr.mxu0 0.0
    %1790 = vmatpush2.msra.mxu0 0.0
    %1791 = vmatprep.mubr.f32.mxu0 0.0
    %1792 = vmatmul.mubr.f32.gmra.mxu0 %v1725
    %v1793 = vpop.f32.mrf.mxu0
    %v1794 = vadd.f32 %v362, %v1793
    %v1795 = vpop.f32.mrf.mxu0
    %1796 = vdwg.mxu0
    %v1797 = vsel %vm438, %v1794, -inf
    %1798 = vmax.xlane.f32.xlu0 %v1797
    %v1799 = vpop.xlane.xlu0 %1798
    %v1800 = vsub.f32 %v1794, %v1799
    %v1801 = vmul.f32 %v1800, 1.442695
    %v1802 = vpow.pop %v1801
    %v1803 = vsel %vm438, %v1802, 0.0
    %1804 = vadd.xlane.f32.xlu0 %v1803
    %v1805 = vpop.xlane.xlu0 %1804
    %v1806 = vlog2.pop %v1805
    %v1807 = vmul.f32 %v1806, 0.6931472
    %v1808 = vadd.f32 %v1799, %v1807
    %v1809 = vld [vmem:[%s3 + $0xc] sm:$0x3]
    %1810 = vset.pattern.permute.xlu0 0
    %1811 = vperm.xlu0 %1810, %v1809
    %v1812 = vpop.permute.xlu0 %1811
    %vm1813 = vcmp.eq.s32.totalorder %v260, %v1812
    %v1814 = vsub.f32 %v1794, %v1808
    %v1815 = vsel %vm1813, %v1814, 0.0
    %v1816 = vsel %vm438, %v1815, 0.0
    %1817 = vadd.xlane.f32.xlu0 %v1816
    %v1818 = vpop.xlane.xlu0 %1817
    %vm1819 = vcmp.ne.s32.totalorder %v1809, 0
    %v1820 = vsel %vm1819, 1, 0
    %v1821 = vcvt.s32.f32 %v1820
    %vm1822 = vcmp.eq.f32.partialorder %v1794, %v1799
    %v1823 = vsel %vm1822, %v260, 128
    %v1824 = vsel %vm438, %v1823, 2147483647
    %v1825 = vand.u32 %v1824, 65535
    %v1826 = vshra.s32 %v1824, 16
    %v1827 = vcvt.s32.f32 %v1825
    %v1828 = vcvt.s32.f32 %v1826
    %1829 = vmin.xlane.f32.xlu0 %v1828
    %v1830 = vpop.xlane.xlu0 %1829
    %vm1831 = vcmp.eq.f32.partialorder %v1828, %v1830
    %v1832 = vsel %vm1831, %v1827, inf
    %1833 = vmin.xlane.f32.xlu0 %v1832
    %v1834 = vpop.xlane.xlu0 %1833
    %v1835 = vcvt.f32.s32 %v1834
    %v1836 = vcvt.f32.s32 %v1830
    %v1837 = vshll.u32 %v1836, 16
    %v1838 = vadd.s32 %v1837, %v1835
    %v1839 = vmul.f32 %v1818, %v1821
    %v1840 = vsub.f32 %v1613, %v1839
    %vm1841 = vcmp.eq.s32.totalorder %v1838, %v1809
    %v1842 = vsel %vm1841, 1, 0
    %v1843 = vcvt.s32.f32 %v1842
    %v1844 = vmul.f32 %v1843, %v1821
    %v1845 = vadd.f32 %v1618, %v1844
    %v1846 = vadd.f32 %v1619, %v1821
    %vm1847 = vcmask 1024
    %v1848 = vsel %vm1847, %v1846, 0.0
    %1849 = vadd.xlane.f32.xlu0 %v1848
    %v1850 = vpop.xlane.xlu0 %1849
    %v1851 = vrot.slane %v1850, 4
    %v1852 = vadd.f32 %v1850, %v1851
    %v1853 = vrot.slane %v1852, 2
    %v1854 = vadd.f32 %v1852, %v1853
    %v1855 = vrot.slane %v1854, 1
    %v1856 = vadd.f32 %v1854, %v1855
    %s1857 = vtos %v1856
    %s1858 = smax.f32 %s1857, 1.0
    %v1859 = vsel %vm1847, %v1840, 0.0
    %1860 = vadd.xlane.f32.xlu0 %v1859
    %v1861 = vpop.xlane.xlu0 %1860
    %v1862 = vrot.slane %v1861, 4
    %v1863 = vadd.f32 %v1861, %v1862
    %v1864 = vrot.slane %v1863, 2
    %v1865 = vadd.f32 %v1863, %v1864
    %v1866 = vrot.slane %v1865, 1
    %v1867 = vadd.f32 %v1865, %v1866
    %s1868 = vtos %v1867
    %v1869 = vstv %s1858
    %v1870 = vrcp.pop %v1869
    %s1871 = vtos %v1870
    %s1872 = smul.f32 %s1868, %s1871
    %s1873 = scalar_lea.smem [#allocation2], 0
    %1874 = sst [smem:[%s1873]] %s1872
    %v1875 = vsel %vm1847, %v1845, 0.0
    %1876 = vadd.xlane.f32.xlu0 %v1875
    %v1877 = vpop.xlane.xlu0 %1876
    %v1878 = vrot.slane %v1877, 4
    %v1879 = vadd.f32 %v1877, %v1878
    %v1880 = vrot.slane %v1879, 2
    %v1881 = vadd.f32 %v1879, %v1880
    %v1882 = vrot.slane %v1881, 1
    %v1883 = vadd.f32 %v1881, %v1882
    %s1884 = vtos %v1883
    %v1885 = vstv %s1858
    %v1886 = vrcp.pop %v1885
    %s1887 = vtos %v1886
    %s1888 = smul.f32 %s1884, %s1887
    %s1889 = scalar_lea.smem [#allocation2], 1
    %1890 = sst [smem:[%s1889]] %s1888
    // Predicated region
    $region26: #{forward.1} parent=1 // pred_check
      _
    $region27: #{forward.1} parent=1 // pred_check_branch
      %1892 = sbr.rel (0) target = $region29
    $region28: #{forward.1} parent=1 // pred_region
      %s1894 = ssub.s32 16, 16
      %1895 = vsyncadd [#allocation3], %s1894
      %s1897 = sshll.u32 %s6, 4
      %s1898 = int_to_ptr.vmem [resolvable:$true] %s1897
      %1900 = dma.smem_to_vmem [#allocation2], 16, %s1898, [#allocation3]
    $region29: #{forward.1} parent=1 // pred_fallthru
      _
    // Predicated region
    $region30: #{forward.1} parent=1 // pred_check
      _
    $region31: #{forward.1} parent=1 // pred_check_branch
      %1902 = sbr.rel (0) target = $region33
    $region32: #{forward.1} parent=1 // pred_region
      %1903 = dma.done [#allocation3], 16
    $region33: #{forward.1} parent=1 // pred_fallthru
      _
    %1904 = sfence
    %1905 = vsyncpa [#allocation3], 1

</llo_original>
